<compile_context>
chip_gen: v7x
topology: tpu7x:2x2x1
jax: 0.10.0
libtpu: 0.0.40
codegen_flags: <defaults>
</compile_context>

<pallas_src>
import functools

import numpy as np
import jax
import jax.numpy as jnp
from jax.experimental import pallas as pl
from jax.experimental.pallas import tpu as pltpu


# ----------------------------- helpers --------------------------------------

def _layernorm(x, gamma, beta, eps=1e-6):
    mean = jnp.mean(x, axis=-1, keepdims=True)
    var = jnp.mean((x - mean) ** 2, axis=-1, keepdims=True)
    return (x - mean) / jnp.sqrt(var + eps) * gamma + beta


def make_sinusoid_table(n_position, d_hid):
    """Exact port of PositionalEncoding._get_sinusoid_encoding_table."""
    def get_position_angle_vec(position):
        return [position / np.power(10000, 2 * (j // 2) / d_hid) for j in range(d_hid)]
    table = np.array([get_position_angle_vec(p) for p in range(n_position)])
    table[:, 0::2] = np.sin(table[:, 0::2])
    table[:, 1::2] = np.cos(table[:, 1::2])
    return jnp.asarray(table, dtype=jnp.float32)  # (n_position, d_hid)


# ----------------------------- fused Pallas kernel ---------------------------

def encoder_fused_kernel(x_ref, bias_ref, pos_ref, g0_ref, b0_ref,
                         wq_ref, wk_ref, wv_ref, wo_ref,
                         g1_ref, b1_ref, w1_ref, fb1_ref, w2_ref, fb2_ref,
                         g2_ref, b2_ref,
                         o_ref, *, n_head, d_k, d_v):
    """Grid = (batch, layer).  o_ref (same block index for every layer) holds the
    (L, D) activation resident in VMEM across the (arbitrary) layer axis."""
    layer = pl.program_id(1)

    # ---- layer 0: positional-encoding add + input LayerNorm -----------------
    @pl.when(layer == 0)
    def _init():
        o_ref[...] = _layernorm(x_ref[...] + pos_ref[...], g0_ref[...], b0_ref[...])

    x = o_ref[...]                                       # (L, D) f32, VMEM-resident
    xb = x.astype(jnp.bfloat16)

    # ---- multi-head self attention ------------------------------------------
    # Single lane-dense projections (1/sqrt(d_k) already folded into wq).
    q = jnp.dot(xb, wq_ref[...], preferred_element_type=jnp.float32).astype(jnp.bfloat16)
    k = jnp.dot(xb, wk_ref[...], preferred_element_type=jnp.float32).astype(jnp.bfloat16)
    v = jnp.dot(xb, wv_ref[...], preferred_element_type=jnp.float32).astype(jnp.bfloat16)

    def split_heads(t, d):                               # (L, H*d) -> (H, L, d)
        return jnp.stack([t[:, h * d:(h + 1) * d] for h in range(n_head)], axis=0)

    qh = split_heads(q, d_k)                             # (H, L, d_k) bf16
    kh = split_heads(k, d_k)
    vh = split_heads(v, d_v)                             # (H, L, d_v) bf16

    s = jnp.einsum("hqd,hkd->hqk", qh, kh,
                   preferred_element_type=jnp.float32)   # (H, L, L) f32
    s = s + bias_ref[...][None]                          # additive mask bias (1,1,L)
    # Fully-masked rows (all-pad sequences) degrade to a uniform softmax,
    # matching the reference behaviour.
    s = s - jnp.max(s, axis=-1, keepdims=True)
    p = jnp.exp(s)
    p = p * pl.reciprocal(jnp.sum(p, axis=-1, keepdims=True), approx=True)

    ctx = jnp.einsum("hqk,hkd->hqd", p.astype(jnp.bfloat16), vh,
                     preferred_element_type=jnp.float32)  # (H, L, d_v)
    # concat(heads) then ONE matmul: head reduction happens inside the MXU K dim.
    ctx_cat = jnp.concatenate([ctx[h] for h in range(n_head)],
                              axis=-1).astype(jnp.bfloat16)     # (L, H*d_v)
    attn = jnp.dot(ctx_cat, wo_ref[...],
                   preferred_element_type=jnp.float32)    # (L, D)

    y = _layernorm(attn + x, g1_ref[...], b1_ref[...])    # post-norm residual, f32

    # ---- position-wise feed forward -----------------------------------------
    h1 = jnp.dot(y.astype(jnp.bfloat16), w1_ref[...],
                 preferred_element_type=jnp.float32) + fb1_ref[...]
    h1 = jnp.maximum(h1, 0.0)                             # ReLU
    z = jnp.dot(h1.astype(jnp.bfloat16), w2_ref[...],
                preferred_element_type=jnp.float32) + fb2_ref[...]
    o_ref[...] = _layernorm(z + y, g2_ref[...], b2_ref[...])
    # o_ref is written back to HBM only when the batch block index changes.


# ----------------------------- host-side packing & wrapper --------------------

def pack_layer_params(layers, *, d_k):
    """Stack per-layer weights with a leading n_layers axis.  Matmul weights in
    bf16; 1/sqrt(d_k) folded into wq (one-time, host side)."""
    scale = float(d_k) ** -0.5

    def stack(key, dtype=jnp.float32):
        return jnp.stack([p[key] for p in layers]).astype(dtype)

    wq = (jnp.stack([p["wq"] for p in layers]) * scale).astype(jnp.bfloat16)
    return dict(
        wq=wq,                                  # (n_layers, D, H*d_k), pre-scaled
        wk=stack("wk", jnp.bfloat16),           # (n_layers, D, H*d_k)
        wv=stack("wv", jnp.bfloat16),           # (n_layers, D, H*d_v)
        wo=stack("wo", jnp.bfloat16),           # (n_layers, H*d_v, D)
        g1=stack("g1"), b1=stack("b1"),
        w1=stack("w1", jnp.bfloat16), fb1=stack("fb1"),
        w2=stack("w2", jnp.bfloat16), fb2=stack("fb2"),
        g2=stack("g2"), b2=stack("b2"),
    )


def encoder_forward(src_seq, src_mask, params, pos, *, n_head, d_k, d_v):
    """Encoder.forward(src_seq, src_mask)[0] with scale_emb=False."""
    # embedding gather (glue, plain JAX)
    x = params["emb"][src_seq]                            # (B, L, D) float32
    B, L, D = x.shape
    packed = pack_layer_params(params["layers"], d_k=d_k)
    n_layers = packed["wq"].shape[0]

    # additive attention-mask bias, hoisted out of the kernel inner math
    bias = jnp.where(src_mask == 0.0, -1e9, 0.0).astype(jnp.float32)   # (B, 1, L)

    def batch_spec(arr):                                   # (B, ...) -> per-batch block
        rest = arr.shape[1:]
        return pl.BlockSpec((pl.Squeezed(),) + rest,
                            lambda b, l: (b,) + (0,) * len(rest))

    def const_spec(arr):                                   # full array, constant block
        shape = arr.shape
        return pl.BlockSpec(shape, lambda b, l: (0,) * len(shape))

    def layer_spec(arr):                                   # (n_layers, ...) -> per-layer block
        rest = arr.shape[1:]
        return pl.BlockSpec((pl.Squeezed(),) + rest,
                            lambda b, l: (l,) + (0,) * len(rest))

    weight_order = ("wq", "wk", "wv", "wo", "g1", "b1",
                    "w1", "fb1", "w2", "fb2", "g2", "b2")
    weights = tuple(packed[k] for k in weight_order)

    in_specs = ([batch_spec(x), batch_spec(bias),
                 const_spec(pos), const_spec(params["ln_g"]), const_spec(params["ln_b"])]
                + [layer_spec(w) for w in weights])

    kern = functools.partial(encoder_fused_kernel, n_head=n_head, d_k=d_k, d_v=d_v)

    return pl.pallas_call(
        kern,
        out_shape=jax.ShapeDtypeStruct((B, L, D), jnp.float32),
        grid_spec=pltpu.PrefetchScalarGridSpec(
            num_scalar_prefetch=0,
            grid=(B, n_layers),                           # batch outer (parallel), layers inner
            in_specs=in_specs,
            # constant block index across the layer axis -> output block stays
            # VMEM-resident and doubles as the activation accumulator.
            out_specs=pl.BlockSpec((pl.Squeezed(), L, D), lambda b, l: (b, 0, 0)),
        ),
        compiler_params=pltpu.CompilerParams(
            dimension_semantics=("parallel", "arbitrary"),
            vmem_limit_bytes=48 * 1024 * 1024),
    )(x, bias, pos, params["ln_g"], params["ln_b"], *weights)


# ----------------------------- pure-JAX reference -----------------------------

def encoder_reference(src_seq, src_mask, params, pos, *, n_head, d_k, d_v):
    B, L = src_seq.shape
    x = params["emb"][src_seq]
    x = x + pos
    x = _layernorm(x, params["ln_g"], params["ln_b"])
    for p in params["layers"]:
        q = (x @ p["wq"]).reshape(B, L, n_head, d_k).transpose(0, 2, 1, 3)
        k = (x @ p["wk"]).reshape(B, L, n_head, d_k).transpose(0, 2, 1, 3)
        v = (x @ p["wv"]).reshape(B, L, n_head, d_v).transpose(0, 2, 1, 3)
        s = jnp.einsum("bhqd,bhkd->bhqk", q / (d_k ** 0.5), k)
        mask4 = src_mask[:, None, :, :]                  # (B,1,1,L)
        s = jnp.where(mask4 == 0.0, -1e9, s)
        a = jax.nn.softmax(s, axis=-1)
        o = jnp.einsum("bhqk,bhkd->bhqd", a, v).transpose(0, 2, 1, 3).reshape(B, L, n_head * d_v)
        o = o @ p["wo"]
        x1 = _layernorm(o + x, p["g1"], p["b1"])
        h = jax.nn.relu(x1 @ p["w1"] + p["fb1"])
        h = h @ p["w2"] + p["fb2"]
        x = _layernorm(h + x1, p["g2"], p["b2"])
    return x


# ----------------------------- main -------------------------------------------

if __name__ == "__main__":
    # small shapes consistent with the module (real deployments should pad
    # D, H*d_k, d_inner to multiples of 128 and rows to multiples of 8)
    B, L = 2, 8
    n_src_vocab = 16
    d_word_vec = d_model = 32
    n_layers = 2
    n_head = 2
    d_k = d_v = 16
    d_inner = 64
    pad_idx = 0
    n_position = 128

    key = jax.random.PRNGKey(0)
    kit = iter(jax.random.split(key, 64))

    def nrm(shape, scale):
        return jax.random.normal(next(kit), shape, dtype=jnp.float32) * scale

    def nrm_bf16(shape, scale):
        # bf16-representable weight values so the bf16 kernel weights equal the f32 reference weights
        return nrm(shape, scale).astype(jnp.bfloat16).astype(jnp.float32)

    # embedding table (padding_idx row zeroed, as nn.Embedding(padding_idx=...) does)
    emb = nrm((n_src_vocab, d_model), 1.0).at[pad_idx].set(0.0)

    layers = []
    for _ in range(n_layers):
        layers.append(dict(
            wq=nrm_bf16((d_model, n_head * d_k), d_model ** -0.5),
            wk=nrm_bf16((d_model, n_head * d_k), d_model ** -0.5),
            wv=nrm_bf16((d_model, n_head * d_v), d_model ** -0.5),
            wo=nrm_bf16((n_head * d_v, d_model), (n_head * d_v) ** -0.5),
            g1=jnp.ones((1, d_model), jnp.float32),
            b1=jnp.zeros((1, d_model), jnp.float32),
            w1=nrm_bf16((d_model, d_inner), d_model ** -0.5),
            fb1=nrm((1, d_inner), 0.02),
            w2=nrm_bf16((d_inner, d_model), d_inner ** -0.5),
            fb2=nrm((1, d_model), 0.02),
            g2=jnp.ones((1, d_model), jnp.float32),
            b2=jnp.zeros((1, d_model), jnp.float32),
        ))

    params = dict(
        emb=emb,
        ln_g=jnp.ones((1, d_model), jnp.float32),
        ln_b=jnp.zeros((1, d_model), jnp.float32),
        layers=layers,
    )

    pos_table = make_sinusoid_table(n_position, d_word_vec)   # (n_position, D)
    pos = pos_table[:L]                                       # (L, D) slice used in forward

    # inputs
    src_seq = jax.random.randint(next(kit), (B, L), 0, n_src_vocab, dtype=jnp.int32)
    src_seq = src_seq.at[1, -2:].set(pad_idx)                 # include some padding
    src_mask = (src_seq != pad_idx)[:, None, :].astype(jnp.float32)   # (B, 1, L)

    out = encoder_forward(src_seq, src_mask, params, pos,
                          n_head=n_head, d_k=d_k, d_v=d_v)
    out = jax.block_until_ready(out)

    ref = encoder_reference(src_seq, src_mask, params, pos,
                            n_head=n_head, d_k=d_k, d_v=d_v)
    # tolerance loosened: bf16 matmuls (f32 accumulation) + approx EUP reciprocal
    np.testing.assert_allclose(np.asarray(out), np.asarray(ref), rtol=5e-2, atol=5e-2)

    print("KERNEL_OK")
</pallas_src>

<mosaic_0001>
module attributes {stable_mosaic.version = 11 : i64} {
  func.func @encoder_fused_kernel(%arg0: i32, %arg1: i32, %arg2: memref<1x8x32xf32, #tpu.memory_space<vmem>>, %arg3: memref<1x1x8xf32, #tpu.memory_space<vmem>>, %arg4: memref<8x32xf32, #tpu.memory_space<vmem>>, %arg5: memref<1x32xf32, #tpu.memory_space<vmem>>, %arg6: memref<1x32xf32, #tpu.memory_space<vmem>>, %arg7: memref<1x32x32xbf16, #tpu.memory_space<vmem>>, %arg8: memref<1x32x32xbf16, #tpu.memory_space<vmem>>, %arg9: memref<1x32x32xbf16, #tpu.memory_space<vmem>>, %arg10: memref<1x32x32xbf16, #tpu.memory_space<vmem>>, %arg11: memref<1x1x32xf32, #tpu.memory_space<vmem>>, %arg12: memref<1x1x32xf32, #tpu.memory_space<vmem>>, %arg13: memref<1x32x64xbf16, #tpu.memory_space<vmem>>, %arg14: memref<1x1x64xf32, #tpu.memory_space<vmem>>, %arg15: memref<1x64x32xbf16, #tpu.memory_space<vmem>>, %arg16: memref<1x1x32xf32, #tpu.memory_space<vmem>>, %arg17: memref<1x1x32xf32, #tpu.memory_space<vmem>>, %arg18: memref<1x1x32xf32, #tpu.memory_space<vmem>>, %arg19: memref<1x8x32xf32, #tpu.memory_space<vmem>>) attributes {dimension_semantics = [#tpu.dimension_semantics<parallel>, #tpu.dimension_semantics<arbitrary>], iteration_bounds = array<i64: 2, 2>, scalar_prefetch = 0 : i64, scratch_operands = 0 : i64, tpu.core_type = #tpu.core_type<tc>, window_params = [{transform_indices = @transform_0, window_bounds = array<i64: 1, 8, 32>}, {transform_indices = @transform_1, window_bounds = array<i64: 1, 1, 8>}, {pipeline_mode = #tpu.pipeline_mode<synchronous>, transform_indices = @transform_2, window_bounds = array<i64: 8, 32>}, {pipeline_mode = #tpu.pipeline_mode<synchronous>, transform_indices = @transform_3, window_bounds = array<i64: 1, 32>}, {pipeline_mode = #tpu.pipeline_mode<synchronous>, transform_indices = @transform_4, window_bounds = array<i64: 1, 32>}, {transform_indices = @transform_5, window_bounds = array<i64: 1, 32, 32>}, {transform_indices = @transform_6, window_bounds = array<i64: 1, 32, 32>}, {transform_indices = @transform_7, window_bounds = array<i64: 1, 32, 32>}, {transform_indices = @transform_8, window_bounds = array<i64: 1, 32, 32>}, {transform_indices = @transform_9, window_bounds = array<i64: 1, 1, 32>}, {transform_indices = @transform_10, window_bounds = array<i64: 1, 1, 32>}, {transform_indices = @transform_11, window_bounds = array<i64: 1, 32, 64>}, {transform_indices = @transform_12, window_bounds = array<i64: 1, 1, 64>}, {transform_indices = @transform_13, window_bounds = array<i64: 1, 64, 32>}, {transform_indices = @transform_14, window_bounds = array<i64: 1, 1, 32>}, {transform_indices = @transform_15, window_bounds = array<i64: 1, 1, 32>}, {transform_indices = @transform_16, window_bounds = array<i64: 1, 1, 32>}, {transform_indices = @transform_17, window_bounds = array<i64: 1, 8, 32>}]} {
    %c0_i32 = arith.constant 0 : i32
    %0 = arith.cmpi eq, %arg1, %c0_i32 : i32
    %1 = arith.extui %0 : i1 to i32
    %c0_i32_0 = arith.constant 0 : i32
    %2 = arith.cmpi ne, %1, %c0_i32_0 : i32
    scf.if %2 {
      %c0_65 = arith.constant 0 : index
      %c0_66 = arith.constant 0 : index
      %c0_67 = arith.constant 0 : index
      %135 = vector.load %arg2[%c0_65, %c0_66, %c0_67] : memref<1x8x32xf32, #tpu.memory_space<vmem>>, vector<1x8x32xf32>
      %136 = vector.shape_cast %135 : vector<1x8x32xf32> to vector<8x32xf32>
      %c0_68 = arith.constant 0 : index
      %c0_69 = arith.constant 0 : index
      %137 = vector.load %arg4[%c0_68, %c0_69] : memref<8x32xf32, #tpu.memory_space<vmem>>, vector<8x32xf32>
      %138 = arith.addf %136, %137 : vector<8x32xf32>
      %c0_70 = arith.constant 0 : index
      %c0_71 = arith.constant 0 : index
      %139 = vector.load %arg5[%c0_70, %c0_71] : memref<1x32xf32, #tpu.memory_space<vmem>>, vector<1x32xf32>
      %c0_72 = arith.constant 0 : index
      %c0_73 = arith.constant 0 : index
      %140 = vector.load %arg6[%c0_72, %c0_73] : memref<1x32xf32, #tpu.memory_space<vmem>>, vector<1x32xf32>
      %cst_74 = arith.constant dense<0.000000e+00> : vector<8xf32>
      %141 = vector.multi_reduction <add>, %138, %cst_74 [1] : vector<8x32xf32> to vector<8xf32>
      %142 = vector.shape_cast %141 : vector<8xf32> to vector<8x1xf32>
      %cst_75 = arith.constant 3.200000e+01 : f32
      %143 = vector.broadcast %cst_75 : f32 to vector<8x1xf32>
      %144 = arith.divf %142, %143 : vector<8x1xf32>
      %145 = vector.broadcast %144 : vector<8x1xf32> to vector<8x32xf32>
      %146 = arith.subf %138, %145 : vector<8x32xf32>
      %147 = arith.mulf %146, %146 : vector<8x32xf32>
      %cst_76 = arith.constant dense<0.000000e+00> : vector<8xf32>
      %148 = vector.multi_reduction <add>, %147, %cst_76 [1] : vector<8x32xf32> to vector<8xf32>
      %149 = vector.shape_cast %148 : vector<8xf32> to vector<8x1xf32>
      %cst_77 = arith.constant 3.200000e+01 : f32
      %150 = vector.broadcast %cst_77 : f32 to vector<8x1xf32>
      %151 = arith.divf %149, %150 : vector<8x1xf32>
      %152 = vector.broadcast %144 : vector<8x1xf32> to vector<8x32xf32>
      %153 = arith.subf %138, %152 : vector<8x32xf32>
      %cst_78 = arith.constant 9.99999997E-7 : f32
      %154 = vector.broadcast %cst_78 : f32 to vector<8x1xf32>
      %155 = arith.addf %151, %154 : vector<8x1xf32>
      %156 = math.sqrt %155 : vector<8x1xf32>
      %157 = vector.broadcast %156 : vector<8x1xf32> to vector<8x32xf32>
      %158 = arith.divf %153, %157 : vector<8x32xf32>
      %159 = vector.broadcast %139 : vector<1x32xf32> to vector<8x32xf32>
      %160 = arith.mulf %158, %159 : vector<8x32xf32>
      %161 = vector.broadcast %140 : vector<1x32xf32> to vector<8x32xf32>
      %162 = arith.addf %160, %161 : vector<8x32xf32>
      %c0_79 = arith.constant 0 : index
      %c0_80 = arith.constant 0 : index
      %c0_81 = arith.constant 0 : index
      %163 = vector.load %arg19[%c0_79, %c0_80, %c0_81] : memref<1x8x32xf32, #tpu.memory_space<vmem>>, vector<1x8x32xf32>
      %164 = vector.shape_cast %163 : vector<1x8x32xf32> to vector<8x32xf32>
      %165 = vector.shape_cast %162 : vector<8x32xf32> to vector<1x8x32xf32>
      tpu.vector_store %arg19[%c0_79, %c0_80, %c0_81], %165 {strides = array<i32>} : memref<1x8x32xf32, #tpu.memory_space<vmem>>, vector<1x8x32xf32>,
    } else {
    }
    %c0 = arith.constant 0 : index
    %c0_1 = arith.constant 0 : index
    %c0_2 = arith.constant 0 : index
    %3 = vector.load %arg19[%c0, %c0_1, %c0_2] : memref<1x8x32xf32, #tpu.memory_space<vmem>>, vector<1x8x32xf32>
    %4 = vector.shape_cast %3 : vector<1x8x32xf32> to vector<8x32xf32>
    %5 = arith.truncf %4 : vector<8x32xf32> to vector<8x32xbf16>
    %c0_3 = arith.constant 0 : index
    %c0_4 = arith.constant 0 : index
    %c0_5 = arith.constant 0 : index
    %6 = vector.load %arg7[%c0_3, %c0_4, %c0_5] : memref<1x32x32xbf16, #tpu.memory_space<vmem>>, vector<1x32x32xbf16>
    %7 = vector.shape_cast %6 : vector<1x32x32xbf16> to vector<32x32xbf16>
    %cst = arith.constant dense<0.000000e+00> : vector<8x32xf32>
    %8 = tpu.matmul %5, %7, %cst {dimension_numbers = #tpu.dot_dimension_numbers<[1], [0], [0], [1], [0, 0, 1, 1], [], []>} : vector<8x32xbf16>, vector<32x32xbf16>, vector<8x32xf32> -> vector<8x32xf32>
    %9 = arith.truncf %8 : vector<8x32xf32> to vector<8x32xbf16>
    %c0_6 = arith.constant 0 : index
    %c0_7 = arith.constant 0 : index
    %c0_8 = arith.constant 0 : index
    %10 = vector.load %arg8[%c0_6, %c0_7, %c0_8] : memref<1x32x32xbf16, #tpu.memory_space<vmem>>, vector<1x32x32xbf16>
    %11 = vector.shape_cast %10 : vector<1x32x32xbf16> to vector<32x32xbf16>
    %cst_9 = arith.constant dense<0.000000e+00> : vector<8x32xf32>
    %12 = tpu.matmul %5, %11, %cst_9 {dimension_numbers = #tpu.dot_dimension_numbers<[1], [0], [0], [1], [0, 0, 1, 1], [], []>} : vector<8x32xbf16>, vector<32x32xbf16>, vector<8x32xf32> -> vector<8x32xf32>
    %13 = arith.truncf %12 : vector<8x32xf32> to vector<8x32xbf16>
    %c0_10 = arith.constant 0 : index
    %c0_11 = arith.constant 0 : index
    %c0_12 = arith.constant 0 : index
    %14 = vector.load %arg9[%c0_10, %c0_11, %c0_12] : memref<1x32x32xbf16, #tpu.memory_space<vmem>>, vector<1x32x32xbf16>
    %15 = vector.shape_cast %14 : vector<1x32x32xbf16> to vector<32x32xbf16>
    %cst_13 = arith.constant dense<0.000000e+00> : vector<8x32xf32>
    %16 = tpu.matmul %5, %15, %cst_13 {dimension_numbers = #tpu.dot_dimension_numbers<[1], [0], [0], [1], [0, 0, 1, 1], [], []>} : vector<8x32xbf16>, vector<32x32xbf16>, vector<8x32xf32> -> vector<8x32xf32>
    %17 = arith.truncf %16 : vector<8x32xf32> to vector<8x32xbf16>
    %18 = vector.extract_strided_slice %9 {offsets = [0, 0], sizes = [8, 16], strides = [1, 1]} : vector<8x32xbf16> to vector<8x16xbf16>
    %19 = vector.extract_strided_slice %9 {offsets = [0, 16], sizes = [8, 16], strides = [1, 1]} : vector<8x32xbf16> to vector<8x16xbf16>
    %20 = vector.shape_cast %18 : vector<8x16xbf16> to vector<1x8x16xbf16>
    %21 = vector.shape_cast %19 : vector<8x16xbf16> to vector<1x8x16xbf16>
    %22 = tpu.concatenate %20, %21 in 0 : vector<1x8x16xbf16>, vector<1x8x16xbf16> -> vector<2x8x16xbf16>
    %23 = vector.extract_strided_slice %13 {offsets = [0, 0], sizes = [8, 16], strides = [1, 1]} : vector<8x32xbf16> to vector<8x16xbf16>
    %24 = vector.extract_strided_slice %13 {offsets = [0, 16], sizes = [8, 16], strides = [1, 1]} : vector<8x32xbf16> to vector<8x16xbf16>
    %25 = vector.shape_cast %23 : vector<8x16xbf16> to vector<1x8x16xbf16>
    %26 = vector.shape_cast %24 : vector<8x16xbf16> to vector<1x8x16xbf16>
    %27 = tpu.concatenate %25, %26 in 0 : vector<1x8x16xbf16>, vector<1x8x16xbf16> -> vector<2x8x16xbf16>
    %28 = vector.extract_strided_slice %17 {offsets = [0, 0], sizes = [8, 16], strides = [1, 1]} : vector<8x32xbf16> to vector<8x16xbf16>
    %29 = vector.extract_strided_slice %17 {offsets = [0, 16], sizes = [8, 16], strides = [1, 1]} : vector<8x32xbf16> to vector<8x16xbf16>
    %30 = vector.shape_cast %28 : vector<8x16xbf16> to vector<1x8x16xbf16>
    %31 = vector.shape_cast %29 : vector<8x16xbf16> to vector<1x8x16xbf16>
    %32 = tpu.concatenate %30, %31 in 0 : vector<1x8x16xbf16>, vector<1x8x16xbf16> -> vector<2x8x16xbf16>
    "tpu.trace_start"() <{level = 10 : i32, message = "hqd,hkd->hqk"}> : () -> ()
    %cst_14 = arith.constant dense<0.000000e+00> : vector<2x8x8xf32>
    %33 = tpu.matmul %22, %27, %cst_14 {dimension_numbers = #tpu.dot_dimension_numbers<[2], [2], [1], [1], [0, 0, 0, 1, 1, 1], [0], [0]>} : vector<2x8x16xbf16>, vector<2x8x16xbf16>, vector<2x8x8xf32> -> vector<2x8x8xf32>
    "tpu.trace_stop"() : () -> ()
    %c0_15 = arith.constant 0 : index
    %c0_16 = arith.constant 0 : index
    %c0_17 = arith.constant 0 : index
    %34 = vector.load %arg3[%c0_15, %c0_16, %c0_17] : memref<1x1x8xf32, #tpu.memory_space<vmem>>, vector<1x1x8xf32>
    %35 = vector.shape_cast %34 : vector<1x1x8xf32> to vector<1x8xf32>
    %36 = vector.shape_cast %35 : vector<1x8xf32> to vector<1x1x8xf32>
    %37 = vector.broadcast %36 : vector<1x1x8xf32> to vector<2x8x8xf32>
    %38 = arith.addf %33, %37 : vector<2x8x8xf32>
    %cst_18 = arith.constant dense<0xFF800000> : vector<2x8xf32>
    %39 = vector.multi_reduction <maximumf>, %38, %cst_18 [2] : vector<2x8x8xf32> to vector<2x8xf32>
    %40 = vector.shape_cast %39 : vector<2x8xf32> to vector<2x8x1xf32>
    %41 = vector.broadcast %40 : vector<2x8x1xf32> to vector<2x8x8xf32>
    %42 = arith.subf %38, %41 : vector<2x8x8xf32>
    %43 = math.exp %42 : vector<2x8x8xf32>
    %cst_19 = arith.constant dense<0.000000e+00> : vector<2x8xf32>
    %44 = vector.multi_reduction <add>, %43, %cst_19 [2] : vector<2x8x8xf32> to vector<2x8xf32>
    %45 = vector.shape_cast %44 : vector<2x8xf32> to vector<2x8x1xf32>
    %46 = tpu.reciprocal %45 {approx = true} : vector<2x8x1xf32> -> vector<2x8x1xf32>
    %47 = vector.broadcast %46 : vector<2x8x1xf32> to vector<2x8x8xf32>
    %48 = arith.mulf %43, %47 : vector<2x8x8xf32>
    %49 = arith.truncf %48 : vector<2x8x8xf32> to vector<2x8x8xbf16>
    "tpu.trace_start"() <{level = 10 : i32, message = "hqk,hkd->hqd"}> : () -> ()
    %cst_20 = arith.constant dense<0.000000e+00> : vector<2x8x16xf32>
    %50 = tpu.matmul %49, %32, %cst_20 {dimension_numbers = #tpu.dot_dimension_numbers<[2], [1], [1], [2], [0, 0, 0, 1, 1, 2], [0], [0]>} : vector<2x8x8xbf16>, vector<2x8x16xbf16>, vector<2x8x16xf32> -> vector<2x8x16xf32>
    "tpu.trace_stop"() : () -> ()
    %51 = vector.extract_strided_slice %50 {offsets = [0, 0, 0], sizes = [1, 8, 16], strides = [1, 1, 1]} : vector<2x8x16xf32> to vector<1x8x16xf32>
    %52 = vector.shape_cast %51 : vector<1x8x16xf32> to vector<8x16xf32>
    %53 = vector.extract_strided_slice %50 {offsets = [1, 0, 0], sizes = [1, 8, 16], strides = [1, 1, 1]} : vector<2x8x16xf32> to vector<1x8x16xf32>
    %54 = vector.shape_cast %53 : vector<1x8x16xf32> to vector<8x16xf32>
    %55 = tpu.concatenate %52, %54 in 1 : vector<8x16xf32>, vector<8x16xf32> -> vector<8x32xf32>
    %56 = arith.truncf %55 : vector<8x32xf32> to vector<8x32xbf16>
    %c0_21 = arith.constant 0 : index
    %c0_22 = arith.constant 0 : index
    %c0_23 = arith.constant 0 : index
    %57 = vector.load %arg10[%c0_21, %c0_22, %c0_23] : memref<1x32x32xbf16, #tpu.memory_space<vmem>>, vector<1x32x32xbf16>
    %58 = vector.shape_cast %57 : vector<1x32x32xbf16> to vector<32x32xbf16>
    %cst_24 = arith.constant dense<0.000000e+00> : vector<8x32xf32>
    %59 = tpu.matmul %56, %58, %cst_24 {dimension_numbers = #tpu.dot_dimension_numbers<[1], [0], [0], [1], [0, 0, 1, 1], [], []>} : vector<8x32xbf16>, vector<32x32xbf16>, vector<8x32xf32> -> vector<8x32xf32>
    %60 = arith.addf %59, %4 : vector<8x32xf32>
    %c0_25 = arith.constant 0 : index
    %c0_26 = arith.constant 0 : index
    %c0_27 = arith.constant 0 : index
    %61 = vector.load %arg11[%c0_25, %c0_26, %c0_27] : memref<1x1x32xf32, #tpu.memory_space<vmem>>, vector<1x1x32xf32>
    %62 = vector.shape_cast %61 : vector<1x1x32xf32> to vector<1x32xf32>
    %c0_28 = arith.constant 0 : index
    %c0_29 = arith.constant 0 : index
    %c0_30 = arith.constant 0 : index
    %63 = vector.load %arg12[%c0_28, %c0_29, %c0_30] : memref<1x1x32xf32, #tpu.memory_space<vmem>>, vector<1x1x32xf32>
    %64 = vector.shape_cast %63 : vector<1x1x32xf32> to vector<1x32xf32>
    %cst_31 = arith.constant dense<0.000000e+00> : vector<8xf32>
    %65 = vector.multi_reduction <add>, %60, %cst_31 [1] : vector<8x32xf32> to vector<8xf32>
    %66 = vector.shape_cast %65 : vector<8xf32> to vector<8x1xf32>
    %cst_32 = arith.constant 3.200000e+01 : f32
    %67 = vector.broadcast %cst_32 : f32 to vector<8x1xf32>
    %68 = arith.divf %66, %67 : vector<8x1xf32>
    %69 = vector.broadcast %68 : vector<8x1xf32> to vector<8x32xf32>
    %70 = arith.subf %60, %69 : vector<8x32xf32>
    %71 = arith.mulf %70, %70 : vector<8x32xf32>
    %cst_33 = arith.constant dense<0.000000e+00> : vector<8xf32>
    %72 = vector.multi_reduction <add>, %71, %cst_33 [1] : vector<8x32xf32> to vector<8xf32>
    %73 = vector.shape_cast %72 : vector<8xf32> to vector<8x1xf32>
    %cst_34 = arith.constant 3.200000e+01 : f32
    %74 = vector.broadcast %cst_34 : f32 to vector<8x1xf32>
    %75 = arith.divf %73, %74 : vector<8x1xf32>
    %76 = vector.broadcast %68 : vector<8x1xf32> to vector<8x32xf32>
    %77 = arith.subf %60, %76 : vector<8x32xf32>
    %cst_35 = arith.constant 9.99999997E-7 : f32
    %78 = vector.broadcast %cst_35 : f32 to vector<8x1xf32>
    %79 = arith.addf %75, %78 : vector<8x1xf32>
    %80 = math.sqrt %79 : vector<8x1xf32>
    %81 = vector.broadcast %80 : vector<8x1xf32> to vector<8x32xf32>
    %82 = arith.divf %77, %81 : vector<8x32xf32>
    %83 = vector.broadcast %62 : vector<1x32xf32> to vector<8x32xf32>
    %84 = arith.mulf %82, %83 : vector<8x32xf32>
    %85 = vector.broadcast %64 : vector<1x32xf32> to vector<8x32xf32>
    %86 = arith.addf %84, %85 : vector<8x32xf32>
    %87 = arith.truncf %86 : vector<8x32xf32> to vector<8x32xbf16>
    %c0_36 = arith.constant 0 : index
    %c0_37 = arith.constant 0 : index
    %c0_38 = arith.constant 0 : index
    %88 = vector.load %arg13[%c0_36, %c0_37, %c0_38] : memref<1x32x64xbf16, #tpu.memory_space<vmem>>, vector<1x32x64xbf16>
    %89 = vector.shape_cast %88 : vector<1x32x64xbf16> to vector<32x64xbf16>
    %cst_39 = arith.constant dense<0.000000e+00> : vector<8x64xf32>
    %90 = tpu.matmul %87, %89, %cst_39 {dimension_numbers = #tpu.dot_dimension_numbers<[1], [0], [0], [1], [0, 0, 1, 1], [], []>} : vector<8x32xbf16>, vector<32x64xbf16>, vector<8x64xf32> -> vector<8x64xf32>
    %c0_40 = arith.constant 0 : index
    %c0_41 = arith.constant 0 : index
    %c0_42 = arith.constant 0 : index
    %91 = vector.load %arg14[%c0_40, %c0_41, %c0_42] : memref<1x1x64xf32, #tpu.memory_space<vmem>>, vector<1x1x64xf32>
    %92 = vector.shape_cast %91 : vector<1x1x64xf32> to vector<1x64xf32>
    %93 = vector.broadcast %92 : vector<1x64xf32> to vector<8x64xf32>
    %94 = arith.addf %90, %93 : vector<8x64xf32>
    %cst_43 = arith.constant 0.000000e+00 : f32
    %95 = vector.broadcast %cst_43 : f32 to vector<8x64xf32>
    %96 = arith.maximumf %94, %95 : vector<8x64xf32>
    %97 = arith.truncf %96 : vector<8x64xf32> to vector<8x64xbf16>
    %c0_44 = arith.constant 0 : index
    %c0_45 = arith.constant 0 : index
    %c0_46 = arith.constant 0 : index
    %98 = vector.load %arg15[%c0_44, %c0_45, %c0_46] : memref<1x64x32xbf16, #tpu.memory_space<vmem>>, vector<1x64x32xbf16>
    %99 = vector.shape_cast %98 : vector<1x64x32xbf16> to vector<64x32xbf16>
    %cst_47 = arith.constant dense<0.000000e+00> : vector<8x32xf32>
    %100 = tpu.matmul %97, %99, %cst_47 {dimension_numbers = #tpu.dot_dimension_numbers<[1], [0], [0], [1], [0, 0, 1, 1], [], []>} : vector<8x64xbf16>, vector<64x32xbf16>, vector<8x32xf32> -> vector<8x32xf32>
    %c0_48 = arith.constant 0 : index
    %c0_49 = arith.constant 0 : index
    %c0_50 = arith.constant 0 : index
    %101 = vector.load %arg16[%c0_48, %c0_49, %c0_50] : memref<1x1x32xf32, #tpu.memory_space<vmem>>, vector<1x1x32xf32>
    %102 = vector.shape_cast %101 : vector<1x1x32xf32> to vector<1x32xf32>
    %103 = vector.broadcast %102 : vector<1x32xf32> to vector<8x32xf32>
    %104 = arith.addf %100, %103 : vector<8x32xf32>
    %105 = arith.addf %104, %86 : vector<8x32xf32>
    %c0_51 = arith.constant 0 : index
    %c0_52 = arith.constant 0 : index
    %c0_53 = arith.constant 0 : index
    %106 = vector.load %arg17[%c0_51, %c0_52, %c0_53] : memref<1x1x32xf32, #tpu.memory_space<vmem>>, vector<1x1x32xf32>
    %107 = vector.shape_cast %106 : vector<1x1x32xf32> to vector<1x32xf32>
    %c0_54 = arith.constant 0 : index
    %c0_55 = arith.constant 0 : index
    %c0_56 = arith.constant 0 : index
    %108 = vector.load %arg18[%c0_54, %c0_55, %c0_56] : memref<1x1x32xf32, #tpu.memory_space<vmem>>, vector<1x1x32xf32>
    %109 = vector.shape_cast %108 : vector<1x1x32xf32> to vector<1x32xf32>
    %cst_57 = arith.constant dense<0.000000e+00> : vector<8xf32>
    %110 = vector.multi_reduction <add>, %105, %cst_57 [1] : vector<8x32xf32> to vector<8xf32>
    %111 = vector.shape_cast %110 : vector<8xf32> to vector<8x1xf32>
    %cst_58 = arith.constant 3.200000e+01 : f32
    %112 = vector.broadcast %cst_58 : f32 to vector<8x1xf32>
    %113 = arith.divf %111, %112 : vector<8x1xf32>
    %114 = vector.broadcast %113 : vector<8x1xf32> to vector<8x32xf32>
    %115 = arith.subf %105, %114 : vector<8x32xf32>
    %116 = arith.mulf %115, %115 : vector<8x32xf32>
    %cst_59 = arith.constant dense<0.000000e+00> : vector<8xf32>
    %117 = vector.multi_reduction <add>, %116, %cst_59 [1] : vector<8x32xf32> to vector<8xf32>
    %118 = vector.shape_cast %117 : vector<8xf32> to vector<8x1xf32>
    %cst_60 = arith.constant 3.200000e+01 : f32
    %119 = vector.broadcast %cst_60 : f32 to vector<8x1xf32>
    %120 = arith.divf %118, %119 : vector<8x1xf32>
    %121 = vector.broadcast %113 : vector<8x1xf32> to vector<8x32xf32>
    %122 = arith.subf %105, %121 : vector<8x32xf32>
    %cst_61 = arith.constant 9.99999997E-7 : f32
    %123 = vector.broadcast %cst_61 : f32 to vector<8x1xf32>
    %124 = arith.addf %120, %123 : vector<8x1xf32>
    %125 = math.sqrt %124 : vector<8x1xf32>
    %126 = vector.broadcast %125 : vector<8x1xf32> to vector<8x32xf32>
    %127 = arith.divf %122, %126 : vector<8x32xf32>
    %128 = vector.broadcast %107 : vector<1x32xf32> to vector<8x32xf32>
    %129 = arith.mulf %127, %128 : vector<8x32xf32>
    %130 = vector.broadcast %109 : vector<1x32xf32> to vector<8x32xf32>
    %131 = arith.addf %129, %130 : vector<8x32xf32>
    %c0_62 = arith.constant 0 : index
    %c0_63 = arith.constant 0 : index
    %c0_64 = arith.constant 0 : index
    %132 = vector.load %arg19[%c0_62, %c0_63, %c0_64] : memref<1x8x32xf32, #tpu.memory_space<vmem>>, vector<1x8x32xf32>
    %133 = vector.shape_cast %132 : vector<1x8x32xf32> to vector<8x32xf32>
    %134 = vector.shape_cast %131 : vector<8x32xf32> to vector<1x8x32xf32>
    tpu.vector_store %arg19[%c0_62, %c0_63, %c0_64], %134 {strides = array<i32>} : memref<1x8x32xf32, #tpu.memory_space<vmem>>, vector<1x8x32xf32>,
    return
  }
  func.func @transform_0(%arg0: i32, %arg1: i32) -> (i32, i32, i32) {
    %c0_i32 = arith.constant 0 : i32
    %c0_i32_0 = arith.constant 0 : i32
    %c0_i32_1 = arith.constant 0 : i32
    return %arg0, %c0_i32, %c0_i32_0 : i32, i32, i32
  }
  func.func @transform_1(%arg0: i32, %arg1: i32) -> (i32, i32, i32) {
    %c0_i32 = arith.constant 0 : i32
    %c0_i32_0 = arith.constant 0 : i32
    %c0_i32_1 = arith.constant 0 : i32
    return %arg0, %c0_i32, %c0_i32_0 : i32, i32, i32
  }
  func.func @transform_2(%arg0: i32, %arg1: i32) -> (i32, i32) {
    %c0_i32 = arith.constant 0 : i32
    %c0_i32_0 = arith.constant 0 : i32
    %c0_i32_1 = arith.constant 0 : i32
    return %c0_i32, %c0_i32_0 : i32, i32
  }
  func.func @transform_3(%arg0: i32, %arg1: i32) -> (i32, i32) {
    %c0_i32 = arith.constant 0 : i32
    %c0_i32_0 = arith.constant 0 : i32
    %c0_i32_1 = arith.constant 0 : i32
    return %c0_i32, %c0_i32_0 : i32, i32
  }
  func.func @transform_4(%arg0: i32, %arg1: i32) -> (i32, i32) {
    %c0_i32 = arith.constant 0 : i32
    %c0_i32_0 = arith.constant 0 : i32
    %c0_i32_1 = arith.constant 0 : i32
    return %c0_i32, %c0_i32_0 : i32, i32
  }
  func.func @transform_5(%arg0: i32, %arg1: i32) -> (i32, i32, i32) {
    %c0_i32 = arith.constant 0 : i32
    %c0_i32_0 = arith.constant 0 : i32
    %c0_i32_1 = arith.constant 0 : i32
    return %arg1, %c0_i32, %c0_i32_0 : i32, i32, i32
  }
  func.func @transform_6(%arg0: i32, %arg1: i32) -> (i32, i32, i32) {
    %c0_i32 = arith.constant 0 : i32
    %c0_i32_0 = arith.constant 0 : i32
    %c0_i32_1 = arith.constant 0 : i32
    return %arg1, %c0_i32, %c0_i32_0 : i32, i32, i32
  }
  func.func @transform_7(%arg0: i32, %arg1: i32) -> (i32, i32, i32) {
    %c0_i32 = arith.constant 0 : i32
    %c0_i32_0 = arith.constant 0 : i32
    %c0_i32_1 = arith.constant 0 : i32
    return %arg1, %c0_i32, %c0_i32_0 : i32, i32, i32
  }
  func.func @transform_8(%arg0: i32, %arg1: i32) -> (i32, i32, i32) {
    %c0_i32 = arith.constant 0 : i32
    %c0_i32_0 = arith.constant 0 : i32
    %c0_i32_1 = arith.constant 0 : i32
    return %arg1, %c0_i32, %c0_i32_0 : i32, i32, i32
  }
  func.func @transform_9(%arg0: i32, %arg1: i32) -> (i32, i32, i32) {
    %c0_i32 = arith.constant 0 : i32
    %c0_i32_0 = arith.constant 0 : i32
    %c0_i32_1 = arith.constant 0 : i32
    return %arg1, %c0_i32, %c0_i32_0 : i32, i32, i32
  }
  func.func @transform_10(%arg0: i32, %arg1: i32) -> (i32, i32, i32) {
    %c0_i32 = arith.constant 0 : i32
    %c0_i32_0 = arith.constant 0 : i32
    %c0_i32_1 = arith.constant 0 : i32
    return %arg1, %c0_i32, %c0_i32_0 : i32, i32, i32
  }
  func.func @transform_11(%arg0: i32, %arg1: i32) -> (i32, i32, i32) {
    %c0_i32 = arith.constant 0 : i32
    %c0_i32_0 = arith.constant 0 : i32
    %c0_i32_1 = arith.constant 0 : i32
    return %arg1, %c0_i32, %c0_i32_0 : i32, i32, i32
  }
  func.func @transform_12(%arg0: i32, %arg1: i32) -> (i32, i32, i32) {
    %c0_i32 = arith.constant 0 : i32
    %c0_i32_0 = arith.constant 0 : i32
    %c0_i32_1 = arith.constant 0 : i32
    return %arg1, %c0_i32, %c0_i32_0 : i32, i32, i32
  }
  func.func @transform_13(%arg0: i32, %arg1: i32) -> (i32, i32, i32) {
    %c0_i32 = arith.constant 0 : i32
    %c0_i32_0 = arith.constant 0 : i32
    %c0_i32_1 = arith.constant 0 : i32
    return %arg1, %c0_i32, %c0_i32_0 : i32, i32, i32
  }
  func.func @transform_14(%arg0: i32, %arg1: i32) -> (i32, i32, i32) {
    %c0_i32 = arith.constant 0 : i32
    %c0_i32_0 = arith.constant 0 : i32
    %c0_i32_1 = arith.constant 0 : i32
    return %arg1, %c0_i32, %c0_i32_0 : i32, i32, i32
  }
  func.func @transform_15(%arg0: i32, %arg1: i32) -> (i32, i32, i32) {
    %c0_i32 = arith.constant 0 : i32
    %c0_i32_0 = arith.constant 0 : i32
    %c0_i32_1 = arith.constant 0 : i32
    return %arg1, %c0_i32, %c0_i32_0 : i32, i32, i32
  }
  func.func @transform_16(%arg0: i32, %arg1: i32) -> (i32, i32, i32) {
    %c0_i32 = arith.constant 0 : i32
    %c0_i32_0 = arith.constant 0 : i32
    %c0_i32_1 = arith.constant 0 : i32
    return %arg1, %c0_i32, %c0_i32_0 : i32, i32, i32
  }
  func.func @transform_17(%arg0: i32, %arg1: i32) -> (i32, i32, i32) {
    %c0_i32 = arith.constant 0 : i32
    %c0_i32_0 = arith.constant 0 : i32
    %c0_i32_1 = arith.constant 0 : i32
    return %arg0, %c0_i32, %c0_i32_0 : i32, i32, i32
  }
}

</mosaic_0001>

<llo_original>
// kernel: tpu_custom_call.1
$region0: #{tpu_custom_call.1}
  #allocation0 [shape = 'u32[]', space=smem, size = 0x4, offset = 0x4, fixed_abs, tag = 'smem constant byte address 0x4 - core index']
  #allocation1 [shape = 'u32[144,128]{1,0:T(1,128)}', space=vmem, size = 0x12000, scoped, tag = 'internal scratch']
  %s0 = inlined_call_operand.hbm [shape: f32[2,8,32], index: 0, kind: input, shape index: {}]
  %s1 = inlined_call_operand.vmem [shape: f32[2,1,8], index: 1, kind: input, shape index: {}]
  %s2 = inlined_call_operand.hbm [shape: f32[8,32], index: 2, kind: input, shape index: {}]
  %s3 = inlined_call_operand.vmem [shape: f32[1,32], index: 3, kind: input, shape index: {}]
  %s4 = inlined_call_operand.hbm [shape: f32[1,32], index: 4, kind: input, shape index: {}]
  %s5 = inlined_call_operand.vmem [shape: bf16[2,32,32], index: 5, kind: input, shape index: {}]
  %s6 = inlined_call_operand.vmem [shape: bf16[2,32,32], index: 6, kind: input, shape index: {}]
  %s7 = inlined_call_operand.vmem [shape: bf16[2,32,32], index: 7, kind: input, shape index: {}]
  %s8 = inlined_call_operand.hbm [shape: bf16[2,32,32], index: 8, kind: input, shape index: {}]
  %s9 = inlined_call_operand.vmem [shape: f32[2,1,32], index: 9, kind: input, shape index: {}]
  %s10 = inlined_call_operand.vmem [shape: f32[2,1,32], index: 10, kind: input, shape index: {}]
  %s11 = inlined_call_operand.hbm [shape: bf16[2,32,64], index: 11, kind: input, shape index: {}]
  %s12 = inlined_call_operand.vmem [shape: f32[2,1,64], index: 12, kind: input, shape index: {}]
  %s13 = inlined_call_operand.vmem [shape: bf16[2,64,32], index: 13, kind: input, shape index: {}]
  %s14 = inlined_call_operand.vmem [shape: f32[2,1,32], index: 14, kind: input, shape index: {}]
  %s15 = inlined_call_operand.vmem [shape: f32[2,1,32], index: 15, kind: input, shape index: {}]
  %s16 = inlined_call_operand.vmem [shape: f32[2,1,32], index: 16, kind: input, shape index: {}]
  %s17 = inlined_call_operand.hbm [shape: f32[2,8,32], index: 17, kind: output, shape index: {}]
  %s18 = sld [smem:[#allocation0]]
  $region125: #{tpu_custom_call.1} parent=0
    _
  %s20 = ssub.s32 1, %s18
  %s21 = scalar_select 0, %s20, %s18
  $region1: #{tpu_custom_call.1} parent=0
    #allocation2 [shape = 'u8[8192]{0}', space=vmem, size = 0x2000, scoped, tag = 'input window, operand 0']
    #allocation3 [shape = 's32[2]{0}', space=sflag, size = 0x8, scoped, tag = 'scoped memory for tpu_custom_call.1']
    #allocation4 [shape = 's32[2]{0}', space=sflag, size = 0x8, scoped, tag = 'scoped memory for tpu_custom_call.1']
    #allocation5 [shape = 'u8[4096]{0}', space=vmem, size = 0x1000, scoped, tag = 'input window, operand 2, single buffered']
    #allocation6 [shape = 's32[1]{0}', space=sflag, size = 0x4, scoped, tag = 'scoped memory for tpu_custom_call.1']
    #allocation7 [shape = 'u8[512]{0}', space=vmem, size = 0x400, scoped, tag = 'input window, operand 4, single buffered']
    #allocation8 [shape = 'u8[16384]{0}', space=vmem, size = 0x4000, scoped, tag = 'input window, operand 8']
    #allocation9 [shape = 's32[2]{0}', space=sflag, size = 0x8, scoped, tag = 'scoped memory for tpu_custom_call.1']
    #allocation10 [shape = 'u8[16384]{0}', space=vmem, size = 0x4000, scoped, tag = 'input window, operand 11']
    #allocation11 [shape = 'u8[8192]{0}', space=vmem, size = 0x2000, scoped, tag = 'output window, operand 0']
    %22 = vsyncpa [#allocation3], 0
    %s23 = scalar_lea.sflag [#allocation3], 1
    %24 = vsyncpa %s23, 0
    %25 = vsyncpa [#allocation6], 0
    %26 = vsyncpa [#allocation9], 0
    %s27 = scalar_lea.sflag [#allocation9], 1
    %28 = vsyncpa %s27, 0
    %29 = vsyncpa [#allocation4], 0
    %s30 = scalar_lea.sflag [#allocation4], 1
    %31 = vsyncpa %s30, 0
    loop: start=0, step=1, limit=6
    $region2: #{tpu_custom_call.1} parent=1 // loop_pre_header
      _
    $region3: #{tpu_custom_call.1} parent=1 // loop_header
      %s33 = sphi 0, %s37
      %p34 = scmp.ge.s32.totalorder %s33, 6
      %s40 = sphi 0, %s52
      %s41 = sphi 0, %s48
      %s42 = sphi 0, %s40
      %s43 = sphi 0, %s41
      %s44 = sphi 0, %s42
      %s45 = sphi 0, %s43
      %s55 = sphi 0, %s57
      %s58 = sphi 0, %s55
      %s59 = sphi 0, %s58
      %s75 = sphi 0, %s59
      %s81 = sphi 0, %s83
      %s84 = sphi 0, %s81
      %s85 = sphi 0, %s84
      %s101 = sphi 0, %s85
      %s105 = sphi 0, %s105
      %s107 = sphi 0, %s105
      %s108 = sphi 0, %s107
      %s122 = sphi 0, %s108
      %s126 = sphi 0, %s126
      %s128 = sphi 0, %s126
      %s129 = sphi 0, %s128
      %s143 = sphi 0, %s129
      %s147 = sphi 0, %s147
      %s149 = sphi 0, %s147
      %s150 = sphi 0, %s149
      %s164 = sphi 0, %s150
      %s170 = sphi 0, %s172
      %s173 = sphi 0, %s170
      %s174 = sphi 0, %s173
      %s190 = sphi 0, %s174
      %s196 = sphi 0, %s198
      %s199 = sphi 0, %s196
      %s200 = sphi 0, %s199
      %s216 = sphi 0, %s200
      %s222 = sphi 0, %s224
      %s225 = sphi 0, %s222
      %s226 = sphi 0, %s225
      %s242 = sphi 0, %s226
      %s248 = sphi 0, %s250
      %s251 = sphi 0, %s248
      %s252 = sphi 0, %s251
      %s268 = sphi 0, %s252
      %s274 = sphi 0, %s276
      %s277 = sphi 0, %s274
      %s278 = sphi 0, %s277
      %s294 = sphi 0, %s278
      %s300 = sphi 0, %s302
      %s303 = sphi 0, %s300
      %s304 = sphi 0, %s303
      %s320 = sphi 0, %s304
      %s326 = sphi 0, %s328
      %s329 = sphi 0, %s326
      %s330 = sphi 0, %s329
      %s346 = sphi 0, %s330
      %s352 = sphi 0, %s354
      %s355 = sphi 0, %s352
      %s356 = sphi 0, %s355
      %s372 = sphi 0, %s356
      %s378 = sphi 0, %s380
      %s381 = sphi 0, %s378
      %s382 = sphi 0, %s381
      %s398 = sphi 0, %s382
      %s404 = sphi 0, %s406
      %s407 = sphi 0, %s404
      %s408 = sphi 0, %s407
      %s424 = sphi 0, %s408
      %s430 = sphi 0, %s432
      %s433 = sphi 0, %s430
      %s434 = sphi 0, %s433
      %s450 = sphi 0, %s434
      %s456 = sphi 0, %s458
      %s459 = sphi 0, %s456
      %s460 = sphi 0, %s459
      %s476 = sphi 0, %s460
      %s482 = sphi 0, %s484
      %s485 = sphi 0, %s482
      %s486 = sphi 0, %s485
      %s502 = sphi 0, %s486
    $region4: #{tpu_custom_call.1} parent=1 // loop_header_branch
      %36 = sbr.rel (%p34) target = $region8
    $region5: #{tpu_custom_call.1} parent=1 // loop_body
      %s38 = ssub.s32 %s33, 1
      %s39 = ssub.s32 %s33, 2
      %s46 = sadd.s32 1, %s41
      %p47 = scmp.ge.s32.totalorder %s46, 2
      %s48 = scalar_select %p47, 0, %s46
      %s49 = sadd.s32 1, %s40
      %s50 = scalar_select %p47, %s49, %s40
      %p51 = scmp.ge.s32.totalorder %s50, 2
      %s52 = scalar_select %p51, 0, %s50
      %s53 = ssub.s32 %s40, %s52
      %p54 = scmp.eq.s32.totalorder %s53, 0
      %s56 = sadd.s32 %s55, 1
      %s57 = scalar_select %p54, %s55, %s56
      %p60 = pneg %p54
      %p61 = scmp.eq.s32.totalorder %s33, 3
      %p62 = por %p60, %p61
      %p63 = scmp.ne.s32.totalorder %s55, %s58
      %p64 = scmp.eq.s32.totalorder %s33, 0
      %p65 = por %p63, %p64
      %p66 = scmp.ne.s32.totalorder %s55, %s58
      %p67 = scmp.eq.s32.totalorder %s38, 3
      %p68 = por %p66, %p67
      %p69 = scmp.ne.s32.totalorder %s58, %s59
      %p70 = scmp.eq.s32.totalorder %s38, 0
      %p71 = por %p69, %p70
      %p72 = scmp.ne.s32.totalorder %s58, %s59
      %p73 = scmp.eq.s32.totalorder %s39, 3
      %p74 = por %p72, %p73
      %p76 = scmp.ne.s32.totalorder %s59, %s75
      %p77 = scmp.eq.s32.totalorder %s39, 0
      %p78 = por %p76, %p77
      %s79 = ssub.s32 %s40, %s52
      %p80 = scmp.eq.s32.totalorder %s79, 0
      %s82 = sadd.s32 %s81, 1
      %s83 = scalar_select %p80, %s81, %s82
      %p86 = pneg %p80
      %p87 = scmp.eq.s32.totalorder %s33, 3
      %p88 = por %p86, %p87
      %p89 = scmp.ne.s32.totalorder %s81, %s84
      %p90 = scmp.eq.s32.totalorder %s33, 0
      %p91 = por %p89, %p90
      %p92 = scmp.ne.s32.totalorder %s81, %s84
      %p93 = scmp.eq.s32.totalorder %s38, 3
      %p94 = por %p92, %p93
      %p95 = scmp.ne.s32.totalorder %s84, %s85
      %p96 = scmp.eq.s32.totalorder %s38, 0
      %p97 = por %p95, %p96
      %p98 = scmp.ne.s32.totalorder %s84, %s85
      %p99 = scmp.eq.s32.totalorder %s39, 3
      %p100 = por %p98, %p99
      %p102 = scmp.ne.s32.totalorder %s85, %s101
      %p103 = scmp.eq.s32.totalorder %s39, 0
      %p104 = por %p102, %p103
      %s106 = sadd.s32 %s105, 1
      %p109 = scmp.eq.s32.totalorder %s33, 3
      %p110 = scmp.ne.s32.totalorder %s105, %s107
      %p111 = scmp.eq.s32.totalorder %s33, 0
      %p112 = por %p110, %p111
      %p113 = scmp.ne.s32.totalorder %s105, %s107
      %p114 = scmp.eq.s32.totalorder %s38, 3
      %p115 = por %p113, %p114
      %p116 = scmp.ne.s32.totalorder %s107, %s108
      %p117 = scmp.eq.s32.totalorder %s38, 0
      %p118 = por %p116, %p117
      %p119 = scmp.ne.s32.totalorder %s107, %s108
      %p120 = scmp.eq.s32.totalorder %s39, 3
      %p121 = por %p119, %p120
      %p123 = scmp.ne.s32.totalorder %s108, %s122
      %p124 = scmp.eq.s32.totalorder %s39, 0
      %p125 = por %p123, %p124
      %s127 = sadd.s32 %s126, 1
      %p130 = scmp.eq.s32.totalorder %s33, 3
      %p131 = scmp.ne.s32.totalorder %s126, %s128
      %p132 = scmp.eq.s32.totalorder %s33, 0
      %p133 = por %p131, %p132
      %p134 = scmp.ne.s32.totalorder %s126, %s128
      %p135 = scmp.eq.s32.totalorder %s38, 3
      %p136 = por %p134, %p135
      %p137 = scmp.ne.s32.totalorder %s128, %s129
      %p138 = scmp.eq.s32.totalorder %s38, 0
      %p139 = por %p137, %p138
      %p140 = scmp.ne.s32.totalorder %s128, %s129
      %p141 = scmp.eq.s32.totalorder %s39, 3
      %p142 = por %p140, %p141
      %p144 = scmp.ne.s32.totalorder %s129, %s143
      %p145 = scmp.eq.s32.totalorder %s39, 0
      %p146 = por %p144, %p145
      %s148 = sadd.s32 %s147, 1
      %p151 = scmp.eq.s32.totalorder %s33, 3
      %p152 = scmp.ne.s32.totalorder %s147, %s149
      %p153 = scmp.eq.s32.totalorder %s33, 0
      %p154 = por %p152, %p153
      %p155 = scmp.ne.s32.totalorder %s147, %s149
      %p156 = scmp.eq.s32.totalorder %s38, 3
      %p157 = por %p155, %p156
      %p158 = scmp.ne.s32.totalorder %s149, %s150
      %p159 = scmp.eq.s32.totalorder %s38, 0
      %p160 = por %p158, %p159
      %p161 = scmp.ne.s32.totalorder %s149, %s150
      %p162 = scmp.eq.s32.totalorder %s39, 3
      %p163 = por %p161, %p162
      %p165 = scmp.ne.s32.totalorder %s150, %s164
      %p166 = scmp.eq.s32.totalorder %s39, 0
      %p167 = por %p165, %p166
      %s168 = ssub.s32 %s41, %s48
      %p169 = scmp.eq.s32.totalorder %s168, 0
      %s171 = sadd.s32 %s170, 1
      %s172 = scalar_select %p169, %s170, %s171
      %p175 = pneg %p169
      %p176 = scmp.eq.s32.totalorder %s33, 3
      %p177 = por %p175, %p176
      %p178 = scmp.ne.s32.totalorder %s170, %s173
      %p179 = scmp.eq.s32.totalorder %s33, 0
      %p180 = por %p178, %p179
      %p181 = scmp.ne.s32.totalorder %s170, %s173
      %p182 = scmp.eq.s32.totalorder %s38, 3
      %p183 = por %p181, %p182
      %p184 = scmp.ne.s32.totalorder %s173, %s174
      %p185 = scmp.eq.s32.totalorder %s38, 0
      %p186 = por %p184, %p185
      %p187 = scmp.ne.s32.totalorder %s173, %s174
      %p188 = scmp.eq.s32.totalorder %s39, 3
      %p189 = por %p187, %p188
      %p191 = scmp.ne.s32.totalorder %s174, %s190
      %p192 = scmp.eq.s32.totalorder %s39, 0
      %p193 = por %p191, %p192
      %s194 = ssub.s32 %s41, %s48
      %p195 = scmp.eq.s32.totalorder %s194, 0
      %s197 = sadd.s32 %s196, 1
      %s198 = scalar_select %p195, %s196, %s197
      %p201 = pneg %p195
      %p202 = scmp.eq.s32.totalorder %s33, 3
      %p203 = por %p201, %p202
      %p204 = scmp.ne.s32.totalorder %s196, %s199
      %p205 = scmp.eq.s32.totalorder %s33, 0
      %p206 = por %p204, %p205
      %p207 = scmp.ne.s32.totalorder %s196, %s199
      %p208 = scmp.eq.s32.totalorder %s38, 3
      %p209 = por %p207, %p208
      %p210 = scmp.ne.s32.totalorder %s199, %s200
      %p211 = scmp.eq.s32.totalorder %s38, 0
      %p212 = por %p210, %p211
      %p213 = scmp.ne.s32.totalorder %s199, %s200
      %p214 = scmp.eq.s32.totalorder %s39, 3
      %p215 = por %p213, %p214
      %p217 = scmp.ne.s32.totalorder %s200, %s216
      %p218 = scmp.eq.s32.totalorder %s39, 0
      %p219 = por %p217, %p218
      %s220 = ssub.s32 %s41, %s48
      %p221 = scmp.eq.s32.totalorder %s220, 0
      %s223 = sadd.s32 %s222, 1
      %s224 = scalar_select %p221, %s222, %s223
      %p227 = pneg %p221
      %p228 = scmp.eq.s32.totalorder %s33, 3
      %p229 = por %p227, %p228
      %p230 = scmp.ne.s32.totalorder %s222, %s225
      %p231 = scmp.eq.s32.totalorder %s33, 0
      %p232 = por %p230, %p231
      %p233 = scmp.ne.s32.totalorder %s222, %s225
      %p234 = scmp.eq.s32.totalorder %s38, 3
      %p235 = por %p233, %p234
      %p236 = scmp.ne.s32.totalorder %s225, %s226
      %p237 = scmp.eq.s32.totalorder %s38, 0
      %p238 = por %p236, %p237
      %p239 = scmp.ne.s32.totalorder %s225, %s226
      %p240 = scmp.eq.s32.totalorder %s39, 3
      %p241 = por %p239, %p240
      %p243 = scmp.ne.s32.totalorder %s226, %s242
      %p244 = scmp.eq.s32.totalorder %s39, 0
      %p245 = por %p243, %p244
      %s246 = ssub.s32 %s41, %s48
      %p247 = scmp.eq.s32.totalorder %s246, 0
      %s249 = sadd.s32 %s248, 1
      %s250 = scalar_select %p247, %s248, %s249
      %p253 = pneg %p247
      %p254 = scmp.eq.s32.totalorder %s33, 3
      %p255 = por %p253, %p254
      %p256 = scmp.ne.s32.totalorder %s248, %s251
      %p257 = scmp.eq.s32.totalorder %s33, 0
      %p258 = por %p256, %p257
      %p259 = scmp.ne.s32.totalorder %s248, %s251
      %p260 = scmp.eq.s32.totalorder %s38, 3
      %p261 = por %p259, %p260
      %p262 = scmp.ne.s32.totalorder %s251, %s252
      %p263 = scmp.eq.s32.totalorder %s38, 0
      %p264 = por %p262, %p263
      %p265 = scmp.ne.s32.totalorder %s251, %s252
      %p266 = scmp.eq.s32.totalorder %s39, 3
      %p267 = por %p265, %p266
      %p269 = scmp.ne.s32.totalorder %s252, %s268
      %p270 = scmp.eq.s32.totalorder %s39, 0
      %p271 = por %p269, %p270
      %s272 = ssub.s32 %s41, %s48
      %p273 = scmp.eq.s32.totalorder %s272, 0
      %s275 = sadd.s32 %s274, 1
      %s276 = scalar_select %p273, %s274, %s275
      %p279 = pneg %p273
      %p280 = scmp.eq.s32.totalorder %s33, 3
      %p281 = por %p279, %p280
      %p282 = scmp.ne.s32.totalorder %s274, %s277
      %p283 = scmp.eq.s32.totalorder %s33, 0
      %p284 = por %p282, %p283
      %p285 = scmp.ne.s32.totalorder %s274, %s277
      %p286 = scmp.eq.s32.totalorder %s38, 3
      %p287 = por %p285, %p286
      %p288 = scmp.ne.s32.totalorder %s277, %s278
      %p289 = scmp.eq.s32.totalorder %s38, 0
      %p290 = por %p288, %p289
      %p291 = scmp.ne.s32.totalorder %s277, %s278
      %p292 = scmp.eq.s32.totalorder %s39, 3
      %p293 = por %p291, %p292
      %p295 = scmp.ne.s32.totalorder %s278, %s294
      %p296 = scmp.eq.s32.totalorder %s39, 0
      %p297 = por %p295, %p296
      %s298 = ssub.s32 %s41, %s48
      %p299 = scmp.eq.s32.totalorder %s298, 0
      %s301 = sadd.s32 %s300, 1
      %s302 = scalar_select %p299, %s300, %s301
      %p305 = pneg %p299
      %p306 = scmp.eq.s32.totalorder %s33, 3
      %p307 = por %p305, %p306
      %p308 = scmp.ne.s32.totalorder %s300, %s303
      %p309 = scmp.eq.s32.totalorder %s33, 0
      %p310 = por %p308, %p309
      %p311 = scmp.ne.s32.totalorder %s300, %s303
      %p312 = scmp.eq.s32.totalorder %s38, 3
      %p313 = por %p311, %p312
      %p314 = scmp.ne.s32.totalorder %s303, %s304
      %p315 = scmp.eq.s32.totalorder %s38, 0
      %p316 = por %p314, %p315
      %p317 = scmp.ne.s32.totalorder %s303, %s304
      %p318 = scmp.eq.s32.totalorder %s39, 3
      %p319 = por %p317, %p318
      %p321 = scmp.ne.s32.totalorder %s304, %s320
      %p322 = scmp.eq.s32.totalorder %s39, 0
      %p323 = por %p321, %p322
      %s324 = ssub.s32 %s41, %s48
      %p325 = scmp.eq.s32.totalorder %s324, 0
      %s327 = sadd.s32 %s326, 1
      %s328 = scalar_select %p325, %s326, %s327
      %p331 = pneg %p325
      %p332 = scmp.eq.s32.totalorder %s33, 3
      %p333 = por %p331, %p332
      %p334 = scmp.ne.s32.totalorder %s326, %s329
      %p335 = scmp.eq.s32.totalorder %s33, 0
      %p336 = por %p334, %p335
      %p337 = scmp.ne.s32.totalorder %s326, %s329
      %p338 = scmp.eq.s32.totalorder %s38, 3
      %p339 = por %p337, %p338
      %p340 = scmp.ne.s32.totalorder %s329, %s330
      %p341 = scmp.eq.s32.totalorder %s38, 0
      %p342 = por %p340, %p341
      %p343 = scmp.ne.s32.totalorder %s329, %s330
      %p344 = scmp.eq.s32.totalorder %s39, 3
      %p345 = por %p343, %p344
      %p347 = scmp.ne.s32.totalorder %s330, %s346
      %p348 = scmp.eq.s32.totalorder %s39, 0
      %p349 = por %p347, %p348
      %s350 = ssub.s32 %s41, %s48
      %p351 = scmp.eq.s32.totalorder %s350, 0
      %s353 = sadd.s32 %s352, 1
      %s354 = scalar_select %p351, %s352, %s353
      %p357 = pneg %p351
      %p358 = scmp.eq.s32.totalorder %s33, 3
      %p359 = por %p357, %p358
      %p360 = scmp.ne.s32.totalorder %s352, %s355
      %p361 = scmp.eq.s32.totalorder %s33, 0
      %p362 = por %p360, %p361
      %p363 = scmp.ne.s32.totalorder %s352, %s355
      %p364 = scmp.eq.s32.totalorder %s38, 3
      %p365 = por %p363, %p364
      %p366 = scmp.ne.s32.totalorder %s355, %s356
      %p367 = scmp.eq.s32.totalorder %s38, 0
      %p368 = por %p366, %p367
      %p369 = scmp.ne.s32.totalorder %s355, %s356
      %p370 = scmp.eq.s32.totalorder %s39, 3
      %p371 = por %p369, %p370
      %p373 = scmp.ne.s32.totalorder %s356, %s372
      %p374 = scmp.eq.s32.totalorder %s39, 0
      %p375 = por %p373, %p374
      %s376 = ssub.s32 %s41, %s48
      %p377 = scmp.eq.s32.totalorder %s376, 0
      %s379 = sadd.s32 %s378, 1
      %s380 = scalar_select %p377, %s378, %s379
      %p383 = pneg %p377
      %p384 = scmp.eq.s32.totalorder %s33, 3
      %p385 = por %p383, %p384
      %p386 = scmp.ne.s32.totalorder %s378, %s381
      %p387 = scmp.eq.s32.totalorder %s33, 0
      %p388 = por %p386, %p387
      %p389 = scmp.ne.s32.totalorder %s378, %s381
      %p390 = scmp.eq.s32.totalorder %s38, 3
      %p391 = por %p389, %p390
      %p392 = scmp.ne.s32.totalorder %s381, %s382
      %p393 = scmp.eq.s32.totalorder %s38, 0
      %p394 = por %p392, %p393
      %p395 = scmp.ne.s32.totalorder %s381, %s382
      %p396 = scmp.eq.s32.totalorder %s39, 3
      %p397 = por %p395, %p396
      %p399 = scmp.ne.s32.totalorder %s382, %s398
      %p400 = scmp.eq.s32.totalorder %s39, 0
      %p401 = por %p399, %p400
      %s402 = ssub.s32 %s41, %s48
      %p403 = scmp.eq.s32.totalorder %s402, 0
      %s405 = sadd.s32 %s404, 1
      %s406 = scalar_select %p403, %s404, %s405
      %p409 = pneg %p403
      %p410 = scmp.eq.s32.totalorder %s33, 3
      %p411 = por %p409, %p410
      %p412 = scmp.ne.s32.totalorder %s404, %s407
      %p413 = scmp.eq.s32.totalorder %s33, 0
      %p414 = por %p412, %p413
      %p415 = scmp.ne.s32.totalorder %s404, %s407
      %p416 = scmp.eq.s32.totalorder %s38, 3
      %p417 = por %p415, %p416
      %p418 = scmp.ne.s32.totalorder %s407, %s408
      %p419 = scmp.eq.s32.totalorder %s38, 0
      %p420 = por %p418, %p419
      %p421 = scmp.ne.s32.totalorder %s407, %s408
      %p422 = scmp.eq.s32.totalorder %s39, 3
      %p423 = por %p421, %p422
      %p425 = scmp.ne.s32.totalorder %s408, %s424
      %p426 = scmp.eq.s32.totalorder %s39, 0
      %p427 = por %p425, %p426
      %s428 = ssub.s32 %s41, %s48
      %p429 = scmp.eq.s32.totalorder %s428, 0
      %s431 = sadd.s32 %s430, 1
      %s432 = scalar_select %p429, %s430, %s431
      %p435 = pneg %p429
      %p436 = scmp.eq.s32.totalorder %s33, 3
      %p437 = por %p435, %p436
      %p438 = scmp.ne.s32.totalorder %s430, %s433
      %p439 = scmp.eq.s32.totalorder %s33, 0
      %p440 = por %p438, %p439
      %p441 = scmp.ne.s32.totalorder %s430, %s433
      %p442 = scmp.eq.s32.totalorder %s38, 3
      %p443 = por %p441, %p442
      %p444 = scmp.ne.s32.totalorder %s433, %s434
      %p445 = scmp.eq.s32.totalorder %s38, 0
      %p446 = por %p444, %p445
      %p447 = scmp.ne.s32.totalorder %s433, %s434
      %p448 = scmp.eq.s32.totalorder %s39, 3
      %p449 = por %p447, %p448
      %p451 = scmp.ne.s32.totalorder %s434, %s450
      %p452 = scmp.eq.s32.totalorder %s39, 0
      %p453 = por %p451, %p452
      %s454 = ssub.s32 %s41, %s48
      %p455 = scmp.eq.s32.totalorder %s454, 0
      %s457 = sadd.s32 %s456, 1
      %s458 = scalar_select %p455, %s456, %s457
      %p461 = pneg %p455
      %p462 = scmp.eq.s32.totalorder %s33, 3
      %p463 = por %p461, %p462
      %p464 = scmp.ne.s32.totalorder %s456, %s459
      %p465 = scmp.eq.s32.totalorder %s33, 0
      %p466 = por %p464, %p465
      %p467 = scmp.ne.s32.totalorder %s456, %s459
      %p468 = scmp.eq.s32.totalorder %s38, 3
      %p469 = por %p467, %p468
      %p470 = scmp.ne.s32.totalorder %s459, %s460
      %p471 = scmp.eq.s32.totalorder %s38, 0
      %p472 = por %p470, %p471
      %p473 = scmp.ne.s32.totalorder %s459, %s460
      %p474 = scmp.eq.s32.totalorder %s39, 3
      %p475 = por %p473, %p474
      %p477 = scmp.ne.s32.totalorder %s460, %s476
      %p478 = scmp.eq.s32.totalorder %s39, 0
      %p479 = por %p477, %p478
      %s480 = ssub.s32 %s40, %s52
      %p481 = scmp.eq.s32.totalorder %s480, 0
      %s483 = sadd.s32 %s482, 1
      %s484 = scalar_select %p481, %s482, %s483
      %p487 = pneg %p481
      %p488 = scmp.eq.s32.totalorder %s33, 3
      %p489 = por %p487, %p488
      %p490 = scmp.ne.s32.totalorder %s482, %s485
      %p491 = scmp.eq.s32.totalorder %s33, 0
      %p492 = por %p490, %p491
      %p493 = scmp.ne.s32.totalorder %s482, %s485
      %p494 = scmp.eq.s32.totalorder %s38, 3
      %p495 = por %p493, %p494
      %p496 = scmp.ne.s32.totalorder %s485, %s486
      %p497 = scmp.eq.s32.totalorder %s38, 0
      %p498 = por %p496, %p497
      %p499 = scmp.ne.s32.totalorder %s485, %s486
      %p500 = scmp.eq.s32.totalorder %s39, 3
      %p501 = por %p499, %p500
      %p503 = scmp.ne.s32.totalorder %s486, %s502
      %p504 = scmp.eq.s32.totalorder %s39, 0
      %p505 = por %p503, %p504
      %p506 = scmp.le.s32.totalorder 1, %s33
      %p507 = scmp.lt.s32.totalorder %s33, 5
      %p508 = pnand %p506, %p507
      %p509 = pneg %p508
      // Predicated region
      $region9: #{tpu_custom_call.1} parent=5 // pred_check
        _
      $region10: #{tpu_custom_call.1} parent=5 // pred_check_branch
        %511 = sbr.rel (%p508) target = $region12
      $region11: #{tpu_custom_call.1} parent=5 // pred_region
        %s512 = ssub.s32 %s33, 1
        // Predicated region
        $region13: #{tpu_custom_call.1} parent=11 // pred_check
          %p513 = pneg %p118
        $region14: #{tpu_custom_call.1} parent=11 // pred_check_branch
          %515 = sbr.rel (%p513) target = $region16
        $region15: #{tpu_custom_call.1} parent=11 // pred_region
          %s517 = ssub.s32 128, 128
          %518 = vsyncadd [#allocation6], %s517
          %s520 = sshll.u32 [#allocation5], 4
          %s521 = int_to_ptr.vmem [resolvable:$true] %s520
          %523 = dma.hbm_to_vmem [thread:$0]  %s2, 128, %s521, [#allocation6]
        $region16: #{tpu_custom_call.1} parent=11 // pred_fallthru
          _
        // Predicated region
        $region17: #{tpu_custom_call.1} parent=11 // pred_check
          %p524 = pneg %p139
        $region18: #{tpu_custom_call.1} parent=11 // pred_check_branch
          %526 = sbr.rel (%p524) target = $region20
        $region19: #{tpu_custom_call.1} parent=11 // pred_region
          _
        $region20: #{tpu_custom_call.1} parent=11 // pred_fallthru
          _
        // Predicated region
        $region21: #{tpu_custom_call.1} parent=11 // pred_check
          %p527 = pneg %p160
        $region22: #{tpu_custom_call.1} parent=11 // pred_check_branch
          %529 = sbr.rel (%p527) target = $region24
        $region23: #{tpu_custom_call.1} parent=11 // pred_region
          %s531 = ssub.s32 16, 16
          %532 = vsyncadd [#allocation6], %s531
          %s534 = sshll.u32 [#allocation7], 4
          %s535 = int_to_ptr.vmem [resolvable:$true] %s534
          %537 = dma.hbm_to_vmem [thread:$0]  %s4, 16, %s535, [#allocation6]
        $region24: #{tpu_custom_call.1} parent=11 // pred_fallthru
          _
      $region12: #{tpu_custom_call.1} parent=5 // pred_fallthru
        _
      %p538 = scmp.lt.s32.totalorder %s33, 4
      // Predicated region
      $region25: #{tpu_custom_call.1} parent=5 // pred_check
        %p539 = pneg %p538
      $region26: #{tpu_custom_call.1} parent=5 // pred_check_branch
        %541 = sbr.rel (%p539) target = $region28
      $region27: #{tpu_custom_call.1} parent=5 // pred_region
        // Predicated region
        $region29: #{tpu_custom_call.1} parent=27 // pred_check
          %p542 = pneg %p65
        $region30: #{tpu_custom_call.1} parent=27 // pred_check_branch
          %544 = sbr.rel (%p542) target = $region32
        $region31: #{tpu_custom_call.1} parent=27 // pred_region
          %s545 = sand.u32 %s55, 1
          %s546 = scalar_lea.sflag [#allocation3], %s545
          %s547 = sand.u32 %s55, 1
          %s548 = smul.addr %s547, 8
          %s549 = scalar_lea.vmem [#allocation2], %s548
          %s551 = ssub.s32 128, 128
          %552 = vsyncadd %s546, %s551
          %s553 = smul.addr %s40, 128
          %s554 = scalar_lea.hbm %s0, %s553
          %s556 = sshll.u32 %s549, 4
          %s557 = int_to_ptr.vmem [resolvable:$true] %s556
          %559 = dma.hbm_to_vmem [thread:$0]  %s554, 128, %s557, %s546
        $region32: #{tpu_custom_call.1} parent=27 // pred_fallthru
          _
        // Predicated region
        $region33: #{tpu_custom_call.1} parent=27 // pred_check
          %p560 = pneg %p91
        $region34: #{tpu_custom_call.1} parent=27 // pred_check_branch
          %562 = sbr.rel (%p560) target = $region36
        $region35: #{tpu_custom_call.1} parent=27 // pred_region
          %p563 = scmp.lt.s32.totalorder %s40, 1
          %s564 = scalar_select %p563, %s40, 1
          %s565 = scalar_lea.vmem %s1, %s564
        $region36: #{tpu_custom_call.1} parent=27 // pred_fallthru
          _
        // Predicated region
        $region37: #{tpu_custom_call.1} parent=27 // pred_check
          %p566 = pneg %p180
        $region38: #{tpu_custom_call.1} parent=27 // pred_check_branch
          %568 = sbr.rel (%p566) target = $region40
        $region39: #{tpu_custom_call.1} parent=27 // pred_region
          %p569 = scmp.lt.s32.totalorder %s41, 1
          %s570 = scalar_select %p569, %s41, 1
          %s571 = smul.addr %s570, 4
          %s572 = smul.addr %s571, 4
          %s573 = scalar_lea.vmem %s5, %s572
        $region40: #{tpu_custom_call.1} parent=27 // pred_fallthru
          _
        // Predicated region
        $region41: #{tpu_custom_call.1} parent=27 // pred_check
          %p574 = pneg %p206
        $region42: #{tpu_custom_call.1} parent=27 // pred_check_branch
          %576 = sbr.rel (%p574) target = $region44
        $region43: #{tpu_custom_call.1} parent=27 // pred_region
          %p577 = scmp.lt.s32.totalorder %s41, 1
          %s578 = scalar_select %p577, %s41, 1
          %s579 = smul.addr %s578, 4
          %s580 = smul.addr %s579, 4
          %s581 = scalar_lea.vmem %s6, %s580
        $region44: #{tpu_custom_call.1} parent=27 // pred_fallthru
          _
        // Predicated region
        $region45: #{tpu_custom_call.1} parent=27 // pred_check
          %p582 = pneg %p232
        $region46: #{tpu_custom_call.1} parent=27 // pred_check_branch
          %584 = sbr.rel (%p582) target = $region48
        $region47: #{tpu_custom_call.1} parent=27 // pred_region
          %p585 = scmp.lt.s32.totalorder %s41, 1
          %s586 = scalar_select %p585, %s41, 1
          %s587 = smul.addr %s586, 4
          %s588 = smul.addr %s587, 4
          %s589 = scalar_lea.vmem %s7, %s588
        $region48: #{tpu_custom_call.1} parent=27 // pred_fallthru
          _
        // Predicated region
        $region49: #{tpu_custom_call.1} parent=27 // pred_check
          %p590 = pneg %p258
        $region50: #{tpu_custom_call.1} parent=27 // pred_check_branch
          %592 = sbr.rel (%p590) target = $region52
        $region51: #{tpu_custom_call.1} parent=27 // pred_region
          %s593 = sand.u32 %s33, 1
          %s594 = scalar_lea.sflag [#allocation9], %s593
          %s595 = sand.u32 %s248, 1
          %s596 = smul.addr %s595, 16
          %s597 = scalar_lea.vmem [#allocation8], %s596
          %s599 = ssub.s32 256, 256
          %600 = vsyncadd %s594, %s599
          %s601 = smul.addr %s41, 4
          %s602 = smul.addr %s601, 64
          %s603 = scalar_lea.hbm %s8, %s602
          %s604 = sshll.u32 %s597, 4
          %s605 = int_to_ptr.vmem [resolvable:$true] %s604
          %610 = dma.hbm_to_vmem [thread:$0]  %s603, 256, %s605, %s594, 64, 64, 4
        $region52: #{tpu_custom_call.1} parent=27 // pred_fallthru
          _
        // Predicated region
        $region53: #{tpu_custom_call.1} parent=27 // pred_check
          %p611 = pneg %p284
        $region54: #{tpu_custom_call.1} parent=27 // pred_check_branch
          %613 = sbr.rel (%p611) target = $region56
        $region55: #{tpu_custom_call.1} parent=27 // pred_region
          %p614 = scmp.lt.s32.totalorder %s41, 1
          %s615 = scalar_select %p614, %s41, 1
          %s616 = scalar_lea.vmem %s9, %s615
        $region56: #{tpu_custom_call.1} parent=27 // pred_fallthru
          _
        // Predicated region
        $region57: #{tpu_custom_call.1} parent=27 // pred_check
          %p617 = pneg %p310
        $region58: #{tpu_custom_call.1} parent=27 // pred_check_branch
          %619 = sbr.rel (%p617) target = $region60
        $region59: #{tpu_custom_call.1} parent=27 // pred_region
          %p620 = scmp.lt.s32.totalorder %s41, 1
          %s621 = scalar_select %p620, %s41, 1
          %s622 = scalar_lea.vmem %s10, %s621
        $region60: #{tpu_custom_call.1} parent=27 // pred_fallthru
          _
        // Predicated region
        $region61: #{tpu_custom_call.1} parent=27 // pred_check
          %p623 = pneg %p336
        $region62: #{tpu_custom_call.1} parent=27 // pred_check_branch
          %625 = sbr.rel (%p623) target = $region64
        $region63: #{tpu_custom_call.1} parent=27 // pred_region
          %s626 = sand.u32 %s33, 1
          %s627 = scalar_lea.sflag [#allocation9], %s626
          %s628 = sand.u32 %s326, 1
          %s629 = smul.addr %s628, 16
          %s630 = scalar_lea.vmem [#allocation10], %s629
          %s632 = ssub.s32 256, 256
          %633 = vsyncadd %s627, %s632
          %s634 = smul.addr %s41, 4
          %s635 = smul.addr %s634, 64
          %s636 = scalar_lea.hbm %s11, %s635
          %s637 = sshll.u32 %s630, 4
          %s638 = int_to_ptr.vmem [resolvable:$true] %s637
          %643 = dma.hbm_to_vmem [thread:$0]  %s636, 256, %s638, %s627, 64, 64, 4
        $region64: #{tpu_custom_call.1} parent=27 // pred_fallthru
          _
        // Predicated region
        $region65: #{tpu_custom_call.1} parent=27 // pred_check
          %p644 = pneg %p362
        $region66: #{tpu_custom_call.1} parent=27 // pred_check_branch
          %646 = sbr.rel (%p644) target = $region68
        $region67: #{tpu_custom_call.1} parent=27 // pred_region
          %p647 = scmp.lt.s32.totalorder %s41, 1
          %s648 = scalar_select %p647, %s41, 1
          %s649 = scalar_lea.vmem %s12, %s648
        $region68: #{tpu_custom_call.1} parent=27 // pred_fallthru
          _
        // Predicated region
        $region69: #{tpu_custom_call.1} parent=27 // pred_check
          %p650 = pneg %p388
        $region70: #{tpu_custom_call.1} parent=27 // pred_check_branch
          %652 = sbr.rel (%p650) target = $region72
        $region71: #{tpu_custom_call.1} parent=27 // pred_region
          %p653 = scmp.lt.s32.totalorder %s41, 1
          %s654 = scalar_select %p653, %s41, 1
          %s655 = smul.addr %s654, 8
          %s656 = smul.addr %s655, 4
          %s657 = scalar_lea.vmem %s13, %s656
        $region72: #{tpu_custom_call.1} parent=27 // pred_fallthru
          _
        // Predicated region
        $region73: #{tpu_custom_call.1} parent=27 // pred_check
          %p658 = pneg %p414
        $region74: #{tpu_custom_call.1} parent=27 // pred_check_branch
          %660 = sbr.rel (%p658) target = $region76
        $region75: #{tpu_custom_call.1} parent=27 // pred_region
          %p661 = scmp.lt.s32.totalorder %s41, 1
          %s662 = scalar_select %p661, %s41, 1
          %s663 = scalar_lea.vmem %s14, %s662
        $region76: #{tpu_custom_call.1} parent=27 // pred_fallthru
          _
        // Predicated region
        $region77: #{tpu_custom_call.1} parent=27 // pred_check
          %p664 = pneg %p440
        $region78: #{tpu_custom_call.1} parent=27 // pred_check_branch
          %666 = sbr.rel (%p664) target = $region80
        $region79: #{tpu_custom_call.1} parent=27 // pred_region
          %p667 = scmp.lt.s32.totalorder %s41, 1
          %s668 = scalar_select %p667, %s41, 1
          %s669 = scalar_lea.vmem %s15, %s668
        $region80: #{tpu_custom_call.1} parent=27 // pred_fallthru
          _
        // Predicated region
        $region81: #{tpu_custom_call.1} parent=27 // pred_check
          %p670 = pneg %p466
        $region82: #{tpu_custom_call.1} parent=27 // pred_check_branch
          %672 = sbr.rel (%p670) target = $region84
        $region83: #{tpu_custom_call.1} parent=27 // pred_region
          %p673 = scmp.lt.s32.totalorder %s41, 1
          %s674 = scalar_select %p673, %s41, 1
          %s675 = scalar_lea.vmem %s16, %s674
        $region84: #{tpu_custom_call.1} parent=27 // pred_fallthru
          _
      $region28: #{tpu_custom_call.1} parent=5 // pred_fallthru
        _
      %p676 = scmp.le.s32.totalorder 1, %s33
      %p677 = scmp.lt.s32.totalorder %s33, 5
      %p678 = pnand %p676, %p677
      %p679 = pneg %p678
      // Predicated region
      $region85: #{tpu_custom_call.1} parent=5 // pred_check
        _
      $region86: #{tpu_custom_call.1} parent=5 // pred_check_branch
        %681 = sbr.rel (%p678) target = $region88
      $region87: #{tpu_custom_call.1} parent=5 // pred_region
        %s682 = ssub.s32 %s33, 1
        %s683 = sand.u32 %s58, 1
        %s684 = scalar_lea.sflag [#allocation3], %s683
        %s685 = sand.u32 %s58, 1
        %s686 = smul.addr %s685, 8
        %s687 = scalar_lea.vmem [#allocation2], %s686
        // Predicated region
        $region89: #{tpu_custom_call.1} parent=87 // pred_check
          %p688 = pneg %p71
        $region90: #{tpu_custom_call.1} parent=87 // pred_check_branch
          %690 = sbr.rel (%p688) target = $region92
        $region91: #{tpu_custom_call.1} parent=87 // pred_region
          %691 = dma.done %s684, 128
        $region92: #{tpu_custom_call.1} parent=87 // pred_fallthru
          _
        // Predicated region
        $region93: #{tpu_custom_call.1} parent=87 // pred_check
          %p692 = pneg %p118
        $region94: #{tpu_custom_call.1} parent=87 // pred_check_branch
          %694 = sbr.rel (%p692) target = $region96
        $region95: #{tpu_custom_call.1} parent=87 // pred_region
          %695 = dma.done [#allocation6], 128
        $region96: #{tpu_custom_call.1} parent=87 // pred_fallthru
          _
        // Predicated region
        $region97: #{tpu_custom_call.1} parent=87 // pred_check
          %p696 = pneg %p160
        $region98: #{tpu_custom_call.1} parent=87 // pred_check_branch
          %698 = sbr.rel (%p696) target = $region100
        $region99: #{tpu_custom_call.1} parent=87 // pred_region
          %699 = dma.done [#allocation6], 16
        $region100: #{tpu_custom_call.1} parent=87 // pred_fallthru
          _
        %s700 = sand.u32 %s38, 1
        %s701 = scalar_lea.sflag [#allocation9], %s700
        %s702 = sand.u32 %s251, 1
        %s703 = smul.addr %s702, 16
        %s704 = scalar_lea.vmem [#allocation8], %s703
        // Predicated region
        $region101: #{tpu_custom_call.1} parent=87 // pred_check
          %p705 = pneg %p264
        $region102: #{tpu_custom_call.1} parent=87 // pred_check_branch
          %707 = sbr.rel (%p705) target = $region104
        $region103: #{tpu_custom_call.1} parent=87 // pred_region
          %708 = dma.done %s701, 256
        $region104: #{tpu_custom_call.1} parent=87 // pred_fallthru
          _
        %s709 = sand.u32 %s38, 1
        %s710 = scalar_lea.sflag [#allocation9], %s709
        %s711 = sand.u32 %s329, 1
        %s712 = smul.addr %s711, 16
        %s713 = scalar_lea.vmem [#allocation10], %s712
        // Predicated region
        $region105: #{tpu_custom_call.1} parent=87 // pred_check
          %p714 = pneg %p342
        $region106: #{tpu_custom_call.1} parent=87 // pred_check_branch
          %716 = sbr.rel (%p714) target = $region108
        $region107: #{tpu_custom_call.1} parent=87 // pred_region
          %717 = dma.done %s710, 256
        $region108: #{tpu_custom_call.1} parent=87 // pred_fallthru
          _
        %s718 = sand.u32 %s58, 1
        %s719 = scalar_lea.sflag [#allocation3], %s718
        %s720 = sand.u32 %s58, 1
        %s721 = smul.addr %s720, 8
        %s722 = scalar_lea.vmem [#allocation2], %s721
        %p723 = pneg %p71
        %p724 = pneg %p68
        %p725 = scmp.lt.s32.totalorder %s42, 1
        %s726 = scalar_select %p725, %s42, 1
        %s727 = scalar_lea.vmem %s1, %s726
        %p728 = pneg %p97
        %p729 = pneg %p94
        %p730 = pneg %p118
        %p731 = pneg %p115
        %p732 = pneg %p139
        %p733 = pneg %p136
        %p734 = pneg %p160
        %p735 = pneg %p157
        %p736 = scmp.lt.s32.totalorder %s43, 1
        %s737 = scalar_select %p736, %s43, 1
        %s738 = smul.addr %s737, 4
        %s739 = smul.addr %s738, 4
        %s740 = scalar_lea.vmem %s5, %s739
        %p741 = pneg %p186
        %p742 = pneg %p183
        %p743 = scmp.lt.s32.totalorder %s43, 1
        %s744 = scalar_select %p743, %s43, 1
        %s745 = smul.addr %s744, 4
        %s746 = smul.addr %s745, 4
        %s747 = scalar_lea.vmem %s6, %s746
        %p748 = pneg %p212
        %p749 = pneg %p209
        %p750 = scmp.lt.s32.totalorder %s43, 1
        %s751 = scalar_select %p750, %s43, 1
        %s752 = smul.addr %s751, 4
        %s753 = smul.addr %s752, 4
        %s754 = scalar_lea.vmem %s7, %s753
        %p755 = pneg %p238
        %p756 = pneg %p235
        %s757 = sand.u32 %s38, 1
        %s758 = scalar_lea.sflag [#allocation9], %s757
        %s759 = sand.u32 %s251, 1
        %s760 = smul.addr %s759, 16
        %s761 = scalar_lea.vmem [#allocation8], %s760
        %p762 = pneg %p264
        %p763 = pneg %p261
        %p764 = scmp.lt.s32.totalorder %s43, 1
        %s765 = scalar_select %p764, %s43, 1
        %s766 = scalar_lea.vmem %s9, %s765
        %p767 = pneg %p290
        %p768 = pneg %p287
        %p769 = scmp.lt.s32.totalorder %s43, 1
        %s770 = scalar_select %p769, %s43, 1
        %s771 = scalar_lea.vmem %s10, %s770
        %p772 = pneg %p316
        %p773 = pneg %p313
        %s774 = sand.u32 %s38, 1
        %s775 = scalar_lea.sflag [#allocation9], %s774
        %s776 = sand.u32 %s329, 1
        %s777 = smul.addr %s776, 16
        %s778 = scalar_lea.vmem [#allocation10], %s777
        %p779 = pneg %p342
        %p780 = pneg %p339
        %p781 = scmp.lt.s32.totalorder %s43, 1
        %s782 = scalar_select %p781, %s43, 1
        %s783 = scalar_lea.vmem %s12, %s782
        %p784 = pneg %p368
        %p785 = pneg %p365
        %p786 = scmp.lt.s32.totalorder %s43, 1
        %s787 = scalar_select %p786, %s43, 1
        %s788 = smul.addr %s787, 8
        %s789 = smul.addr %s788, 4
        %s790 = scalar_lea.vmem %s13, %s789
        %p791 = pneg %p394
        %p792 = pneg %p391
        %p793 = scmp.lt.s32.totalorder %s43, 1
        %s794 = scalar_select %p793, %s43, 1
        %s795 = scalar_lea.vmem %s14, %s794
        %p796 = pneg %p420
        %p797 = pneg %p417
        %p798 = scmp.lt.s32.totalorder %s43, 1
        %s799 = scalar_select %p798, %s43, 1
        %s800 = scalar_lea.vmem %s15, %s799
        %p801 = pneg %p446
        %p802 = pneg %p443
        %p803 = scmp.lt.s32.totalorder %s43, 1
        %s804 = scalar_select %p803, %s43, 1
        %s805 = scalar_lea.vmem %s16, %s804
        %p806 = pneg %p472
        %p807 = pneg %p469
        %p808 = pneg %p498
        %p809 = pneg %p495
        %s810 = sand.u32 %s485, 1
        %s811 = scalar_lea.sflag [#allocation4], %s810
        %s812 = sand.u32 %s485, 1
        %s813 = smul.addr %s812, 8
        %s814 = scalar_lea.vmem [#allocation11], %s813
        %p815 = scmp.lt.s32.totalorder %s42, 1
        %s816 = scalar_select %p815, %s42, 1
        %s817 = scalar_lea.vmem %s1, %s816
        %p818 = scmp.lt.s32.totalorder %s43, 1
        %s819 = scalar_select %p818, %s43, 1
        %s820 = smul.addr %s819, 4
        %s821 = smul.addr %s820, 4
        %s822 = scalar_lea.vmem %s5, %s821
        %p823 = scmp.lt.s32.totalorder %s43, 1
        %s824 = scalar_select %p823, %s43, 1
        %s825 = smul.addr %s824, 4
        %s826 = smul.addr %s825, 4
        %s827 = scalar_lea.vmem %s6, %s826
        %p828 = scmp.lt.s32.totalorder %s43, 1
        %s829 = scalar_select %p828, %s43, 1
        %s830 = smul.addr %s829, 4
        %s831 = smul.addr %s830, 4
        %s832 = scalar_lea.vmem %s7, %s831
        %p833 = scmp.lt.s32.totalorder %s43, 1
        %s834 = scalar_select %p833, %s43, 1
        %s835 = scalar_lea.vmem %s9, %s834
        %p836 = scmp.lt.s32.totalorder %s43, 1
        %s837 = scalar_select %p836, %s43, 1
        %s838 = scalar_lea.vmem %s10, %s837
        %p839 = scmp.lt.s32.totalorder %s43, 1
        %s840 = scalar_select %p839, %s43, 1
        %s841 = scalar_lea.vmem %s12, %s840
        %p842 = scmp.lt.s32.totalorder %s43, 1
        %s843 = scalar_select %p842, %s43, 1
        %s844 = smul.addr %s843, 8
        %s845 = smul.addr %s844, 4
        %s846 = scalar_lea.vmem %s13, %s845
        %p847 = scmp.lt.s32.totalorder %s43, 1
        %s848 = scalar_select %p847, %s43, 1
        %s849 = scalar_lea.vmem %s14, %s848
        %p850 = scmp.lt.s32.totalorder %s43, 1
        %s851 = scalar_select %p850, %s43, 1
        %s852 = scalar_lea.vmem %s15, %s851
        %p853 = scmp.lt.s32.totalorder %s43, 1
        %s854 = scalar_select %p853, %s43, 1
        %s855 = scalar_lea.vmem %s16, %s854
        %p857 = scmp.eq.s32.totalorder %s43, 0
        // Predicated region
        $region109: #{tpu_custom_call.1} parent=87 // pred_check
          %p858 = pneg %p857
        $region110: #{tpu_custom_call.1} parent=87 // pred_check_branch
          %860 = sbr.rel (%p858) target = $region112
        $region111: #{tpu_custom_call.1} parent=87 // pred_region
          %v861 = vld [vmem:[%s687] sm:$0xff]
          %v862 = vld [vmem:[#allocation5] sm:$0xff]
          %v863 = vadd.f32 %v861, %v862
          %v864 = vld [vmem:[%s3] sm:$0x1]
          %v865 = vld [vmem:[#allocation7] sm:$0x1]
          %vm866 = vcmask 261120
          %v867 = vsel %vm866, %v863, 0.0
          %868 = vadd.xlane.f32.xlu0 %v867
          %v869 = vpop.xlane.xlu0 %868
          %v870 = vrcp.pop 32.0
          %v871 = vmul.f32 %v869, %v870
          %v872 = vsub.f32 %v863, %v871
          %v873 = vmul.f32 %v872, %v872
          %v874 = vsel %vm866, %v873, 0.0
          %875 = vadd.xlane.f32.xlu0 %v874
          %v876 = vpop.xlane.xlu0 %875
          %v877 = vmul.f32 %v876, %v870
          %v878 = vadd.f32 %v877, 1e-06
          %v879 = vrsqrt.pop %v878
          %v880 = vmul.f32 %v878, %v879
          %vm881 = vcmp.eq.f32.partialorder %v878, inf
          %v882 = vsel %vm881, %v878, %v880
          %vm883 = vcmp.eq.f32.partialorder %v878, 0.0
          %v884 = vand.u32 %v878, 2147483648
          %v885 = vsel %vm883, %v884, %v882
          %v886 = vrcp.pop %v885
          %v887 = vmul.f32 %v872, %v886
          %v889 = vlaneseq
          %v890 = vshrl.u32 %v889, 7
          %v891 = vsub.s32 0, %v890
          %v892 = vrot.slane %v864, %v891
          %v894 = vmul.f32 %v887, %v892
          %v896 = vlaneseq
          %v897 = vshrl.u32 %v896, 7
          %v898 = vsub.s32 0, %v897
          %v899 = vrot.slane %v865, %v898
          %v901 = vadd.f32 %v894, %v899
          %902 = vst.msk [vmem:[%s814] sm:$0xff] %vm866, %v901
        $region112: #{tpu_custom_call.1} parent=87 // pred_fallthru
          _
        %v903 = vld [vmem:[%s814] sm:$0xff]
        %v904 = vpack.c.bf16 %v903, %v903
        %v905 = vld [vmem:[%s822] sm:$0xf]
        %v906 = vld [vmem:[%s822 + $0x4] sm:$0xf]
        %v907 = vld [vmem:[%s822 + $0x8] sm:$0xf]
        %v908 = vld [vmem:[%s822 + $0xc] sm:$0xf]
        %v913 = vunpack.c.l.b16 %v905
        %v914 = vunpack.c.l.b16 %v906
        %v915 = vunpack.c.l.b16 %v907
        %v916 = vunpack.c.l.b16 %v908
        %v917 = vpack.c.b16 %v914, %v913
        %v918 = vpack.c.b16 %v916, %v915
        %vm921 = vcmask 261120
        %v923 = vsel %vm921, %v904, 0
        %925 = vmatprep.subr.bf16.mxu0 0
        %926 = vmatpush1.bf16.msra.mxu0 %v917
        %927 = vmatprep.subr.bf16.mxu0 0
        %928 = vmatpush1.bf16.msra.mxu0 %v918
        %929 = vmatprep.subr.bf16.mxu0 0
        %930 = vmatpush1.bf16.msra.mxu0 0
        %931 = vmatprep.subr.bf16.mxu0 0
        %932 = vmatpush1.bf16.msra.mxu0 0
        %933 = vmatprep.subr.bf16.mxu0 0
        %934 = vmatpush1.bf16.msra.mxu0 0
        %935 = vmatprep.subr.bf16.mxu0 0
        %936 = vmatpush1.bf16.msra.mxu0 0
        %937 = vmatprep.subr.bf16.mxu0 0
        %938 = vmatpush1.bf16.msra.mxu0 0
        %939 = vmatprep.subr.bf16.mxu0 0
        %940 = vmatpush1.bf16.msra.mxu0 0
        %941 = vmatprep.subr.bf16.mxu0 0
        %942 = vmatpush1.bf16.msra.mxu0 0
        %943 = vmatprep.subr.bf16.mxu0 0
        %944 = vmatpush1.bf16.msra.mxu0 0
        %945 = vmatprep.subr.bf16.mxu0 0
        %946 = vmatpush1.bf16.msra.mxu0 0
        %947 = vmatprep.subr.bf16.mxu0 0
        %948 = vmatpush1.bf16.msra.mxu0 0
        %949 = vmatprep.subr.bf16.mxu0 0
        %950 = vmatpush1.bf16.msra.mxu0 0
        %951 = vmatprep.subr.bf16.mxu0 0
        %952 = vmatpush1.bf16.msra.mxu0 0
        %953 = vmatprep.subr.bf16.mxu0 0
        %954 = vmatpush1.bf16.msra.mxu0 0
        %955 = vmatprep.subr.bf16.mxu0 0
        %956 = vmatpush1.bf16.msra.mxu0 0
        %957 = vmatprep.mubr.bf16.mxu0 0
        %958 = vmatmul.mubr.bf16.gmra.mrb[0].mxu0 %v923
        %v959 = vpop.f32.mrb[0].mxu0
        %v960 = vadd.f32 0.0, %v959
        %v961 = vpop.f32.mrb[0].mxu0
        %v962 = vpop.f32.mrb[0].mxu0
        %v963 = vpop.f32.mrb[0].mxu0
        %964 = vdwg.mxu0
        %v965 = vpack.c.bf16 %v960, %v960
        %v966 = vld [vmem:[%s827] sm:$0xf]
        %v967 = vld [vmem:[%s827 + $0x4] sm:$0xf]
        %v968 = vld [vmem:[%s827 + $0x8] sm:$0xf]
        %v969 = vld [vmem:[%s827 + $0xc] sm:$0xf]
        %v974 = vunpack.c.l.b16 %v966
        %v975 = vunpack.c.l.b16 %v967
        %v976 = vunpack.c.l.b16 %v968
        %v977 = vunpack.c.l.b16 %v969
        %v978 = vpack.c.b16 %v975, %v974
        %v979 = vpack.c.b16 %v977, %v976
        %982 = vmatprep.subr.bf16.mxu0 0
        %983 = vmatpush1.bf16.msra.mxu0 %v978
        %984 = vmatprep.subr.bf16.mxu0 0
        %985 = vmatpush1.bf16.msra.mxu0 %v979
        %986 = vmatprep.subr.bf16.mxu0 0
        %987 = vmatpush1.bf16.msra.mxu0 0
        %988 = vmatprep.subr.bf16.mxu0 0
        %989 = vmatpush1.bf16.msra.mxu0 0
        %990 = vmatprep.subr.bf16.mxu0 0
        %991 = vmatpush1.bf16.msra.mxu0 0
        %992 = vmatprep.subr.bf16.mxu0 0
        %993 = vmatpush1.bf16.msra.mxu0 0
        %994 = vmatprep.subr.bf16.mxu0 0
        %995 = vmatpush1.bf16.msra.mxu0 0
        %996 = vmatprep.subr.bf16.mxu0 0
        %997 = vmatpush1.bf16.msra.mxu0 0
        %998 = vmatprep.subr.bf16.mxu0 0
        %999 = vmatpush1.bf16.msra.mxu0 0
        %1000 = vmatprep.subr.bf16.mxu0 0
        %1001 = vmatpush1.bf16.msra.mxu0 0
        %1002 = vmatprep.subr.bf16.mxu0 0
        %1003 = vmatpush1.bf16.msra.mxu0 0
        %1004 = vmatprep.subr.bf16.mxu0 0
        %1005 = vmatpush1.bf16.msra.mxu0 0
        %1006 = vmatprep.subr.bf16.mxu0 0
        %1007 = vmatpush1.bf16.msra.mxu0 0
        %1008 = vmatprep.subr.bf16.mxu0 0
        %1009 = vmatpush1.bf16.msra.mxu0 0
        %1010 = vmatprep.subr.bf16.mxu0 0
        %1011 = vmatpush1.bf16.msra.mxu0 0
        %1012 = vmatprep.subr.bf16.mxu0 0
        %1013 = vmatpush1.bf16.msra.mxu0 0
        %1014 = vmatprep.mubr.bf16.mxu0 0
        %1015 = vmatmul.mubr.bf16.gmra.mrb[0].mxu0 %v923
        %v1016 = vpop.f32.mrb[0].mxu0
        %v1017 = vadd.f32 0.0, %v1016
        %v1018 = vpop.f32.mrb[0].mxu0
        %v1019 = vpop.f32.mrb[0].mxu0
        %v1020 = vpop.f32.mrb[0].mxu0
        %1021 = vdwg.mxu0
        %v1022 = vpack.c.bf16 %v1017, %v1017
        %v1023 = vld [vmem:[%s832] sm:$0xf]
        %v1024 = vld [vmem:[%s832 + $0x4] sm:$0xf]
        %v1025 = vld [vmem:[%s832 + $0x8] sm:$0xf]
        %v1026 = vld [vmem:[%s832 + $0xc] sm:$0xf]
        %v1031 = vunpack.c.l.b16 %v1023
        %v1032 = vunpack.c.l.b16 %v1024
        %v1033 = vunpack.c.l.b16 %v1025
        %v1034 = vunpack.c.l.b16 %v1026
        %v1035 = vpack.c.b16 %v1032, %v1031
        %v1036 = vpack.c.b16 %v1034, %v1033
        %1039 = vmatprep.subr.bf16.mxu0 0
        %1040 = vmatpush1.bf16.msra.mxu0 %v1035
        %1041 = vmatprep.subr.bf16.mxu0 0
        %1042 = vmatpush1.bf16.msra.mxu0 %v1036
        %1043 = vmatprep.subr.bf16.mxu0 0
        %1044 = vmatpush1.bf16.msra.mxu0 0
        %1045 = vmatprep.subr.bf16.mxu0 0
        %1046 = vmatpush1.bf16.msra.mxu0 0
        %1047 = vmatprep.subr.bf16.mxu0 0
        %1048 = vmatpush1.bf16.msra.mxu0 0
        %1049 = vmatprep.subr.bf16.mxu0 0
        %1050 = vmatpush1.bf16.msra.mxu0 0
        %1051 = vmatprep.subr.bf16.mxu0 0
        %1052 = vmatpush1.bf16.msra.mxu0 0
        %1053 = vmatprep.subr.bf16.mxu0 0
        %1054 = vmatpush1.bf16.msra.mxu0 0
        %1055 = vmatprep.subr.bf16.mxu0 0
        %1056 = vmatpush1.bf16.msra.mxu0 0
        %1057 = vmatprep.subr.bf16.mxu0 0
        %1058 = vmatpush1.bf16.msra.mxu0 0
        %1059 = vmatprep.subr.bf16.mxu0 0
        %1060 = vmatpush1.bf16.msra.mxu0 0
        %1061 = vmatprep.subr.bf16.mxu0 0
        %1062 = vmatpush1.bf16.msra.mxu0 0
        %1063 = vmatprep.subr.bf16.mxu0 0
        %1064 = vmatpush1.bf16.msra.mxu0 0
        %1065 = vmatprep.subr.bf16.mxu0 0
        %1066 = vmatpush1.bf16.msra.mxu0 0
        %1067 = vmatprep.subr.bf16.mxu0 0
        %1068 = vmatpush1.bf16.msra.mxu0 0
        %1069 = vmatprep.subr.bf16.mxu0 0
        %1070 = vmatpush1.bf16.msra.mxu0 0
        %1071 = vmatprep.mubr.bf16.mxu0 0
        %1072 = vmatmul.mubr.bf16.gmra.mrb[0].mxu0 %v923
        %v1073 = vpop.f32.mrb[0].mxu0
        %v1074 = vadd.f32 0.0, %v1073
        %v1075 = vpop.f32.mrb[0].mxu0
        %v1076 = vpop.f32.mrb[0].mxu0
        %v1077 = vpop.f32.mrb[0].mxu0
        %1078 = vdwg.mxu0
        %v1079 = vpack.c.bf16 %v1074, %v1074
        %1081 = vrot.lane.b32.xlu0 %v965, 112
        %v1082 = vpop.permute.xlu0 %1081
        %1084 = vrot.lane.b32.xlu0 %v1022, 112
        %v1085 = vpop.permute.xlu0 %1084
        %1087 = vrot.lane.b32.xlu0 %v1079, 112
        %v1088 = vpop.permute.xlu0 %1087
        %v1089 = vld [vmem:[%s817] sm:$0x1]
        %v1091 = vlaneseq
        %v1092 = vshrl.u32 %v1091, 7
        %v1093 = vsub.s32 0, %v1092
        %v1094 = vrot.slane %v1089, %v1093
        %vm1096 = vcmask 130048
        %v1098 = vsel %vm1096, %v965, 0
        %v1101 = vsel %vm1096, %v1022, 0
        %1103 = vmatprep.subr.bf16.mxu0 0
        %1104 = vmatpush1.bf16.xpose.msra.mxu0 %v1101
        %1105 = vmatprep.subr.bf16.mxu0 0
        %1106 = vmatpush1.bf16.xpose.msra.mxu0 0
        %1107 = vmatprep.subr.bf16.mxu0 0
        %1108 = vmatpush1.bf16.xpose.msra.mxu0 0
        %1109 = vmatprep.subr.bf16.mxu0 0
        %1110 = vmatpush1.bf16.xpose.msra.mxu0 0
        %1111 = vmatprep.subr.bf16.mxu0 0
        %1112 = vmatpush1.bf16.xpose.msra.mxu0 0
        %1113 = vmatprep.subr.bf16.mxu0 0
        %1114 = vmatpush1.bf16.xpose.msra.mxu0 0
        %1115 = vmatprep.subr.bf16.mxu0 0
        %1116 = vmatpush1.bf16.xpose.msra.mxu0 0
        %1117 = vmatprep.subr.bf16.mxu0 0
        %1118 = vmatpush1.bf16.xpose.msra.mxu0 0
        %1119 = vmatprep.subr.bf16.mxu0 0
        %1120 = vmatpush1.bf16.xpose.msra.mxu0 0
        %1121 = vmatprep.subr.bf16.mxu0 0
        %1122 = vmatpush1.bf16.xpose.msra.mxu0 0
        %1123 = vmatprep.subr.bf16.mxu0 0
        %1124 = vmatpush1.bf16.xpose.msra.mxu0 0
        %1125 = vmatprep.subr.bf16.mxu0 0
        %1126 = vmatpush1.bf16.xpose.msra.mxu0 0
        %1127 = vmatprep.subr.bf16.mxu0 0
        %1128 = vmatpush1.bf16.xpose.msra.mxu0 0
        %1129 = vmatprep.subr.bf16.mxu0 0
        %1130 = vmatpush1.bf16.xpose.msra.mxu0 0
        %1131 = vmatprep.subr.bf16.mxu0 0
        %1132 = vmatpush1.bf16.xpose.msra.mxu0 0
        %1133 = vmatprep.subr.bf16.mxu0 0
        %1134 = vmatpush1.bf16.xpose.msra.mxu0 0
        %1135 = vmatprep.mubr.bf16.mxu0 0
        %1136 = vmatmul.mubr.bf16.gmra.mrb[0].mxu0 %v1098
        %v1137 = vpop.f32.mrb[0].mxu0
        %v1138 = vadd.f32 %v1094, %v1137
        %v1139 = vpop.f32.mrb[0].mxu0
        %v1140 = vpop.f32.mrb[0].mxu0
        %v1141 = vpop.f32.mrb[0].mxu0
        %1142 = vdwg.mxu0
        %v1144 = vsel %vm1096, %v1082, 0
        %v1147 = vsel %vm1096, %v1085, 0
        %1149 = vmatprep.subr.bf16.mxu0 0
        %1150 = vmatpush1.bf16.xpose.msra.mxu0 %v1147
        %1151 = vmatprep.subr.bf16.mxu0 0
        %1152 = vmatpush1.bf16.xpose.msra.mxu0 0
        %1153 = vmatprep.subr.bf16.mxu0 0
        %1154 = vmatpush1.bf16.xpose.msra.mxu0 0
        %1155 = vmatprep.subr.bf16.mxu0 0
        %1156 = vmatpush1.bf16.xpose.msra.mxu0 0
        %1157 = vmatprep.subr.bf16.mxu0 0
        %1158 = vmatpush1.bf16.xpose.msra.mxu0 0
        %1159 = vmatprep.subr.bf16.mxu0 0
        %1160 = vmatpush1.bf16.xpose.msra.mxu0 0
        %1161 = vmatprep.subr.bf16.mxu0 0
        %1162 = vmatpush1.bf16.xpose.msra.mxu0 0
        %1163 = vmatprep.subr.bf16.mxu0 0
        %1164 = vmatpush1.bf16.xpose.msra.mxu0 0
        %1165 = vmatprep.subr.bf16.mxu0 0
        %1166 = vmatpush1.bf16.xpose.msra.mxu0 0
        %1167 = vmatprep.subr.bf16.mxu0 0
        %1168 = vmatpush1.bf16.xpose.msra.mxu0 0
        %1169 = vmatprep.subr.bf16.mxu0 0
        %1170 = vmatpush1.bf16.xpose.msra.mxu0 0
        %1171 = vmatprep.subr.bf16.mxu0 0
        %1172 = vmatpush1.bf16.xpose.msra.mxu0 0
        %1173 = vmatprep.subr.bf16.mxu0 0
        %1174 = vmatpush1.bf16.xpose.msra.mxu0 0
        %1175 = vmatprep.subr.bf16.mxu0 0
        %1176 = vmatpush1.bf16.xpose.msra.mxu0 0
        %1177 = vmatprep.subr.bf16.mxu0 0
        %1178 = vmatpush1.bf16.xpose.msra.mxu0 0
        %1179 = vmatprep.subr.bf16.mxu0 0
        %1180 = vmatpush1.bf16.xpose.msra.mxu0 0
        %1181 = vmatprep.mubr.bf16.mxu0 0
        %1182 = vmatmul.mubr.bf16.gmra.mrb[0].mxu0 %v1144
        %v1183 = vpop.f32.mrb[0].mxu0
        %v1184 = vadd.f32 %v1094, %v1183
        %v1185 = vpop.f32.mrb[0].mxu0
        %v1186 = vpop.f32.mrb[0].mxu0
        %v1187 = vpop.f32.mrb[0].mxu0
        %1188 = vdwg.mxu0
        %vm1189 = vcmask 64512
        %v1190 = vsel %vm1189, %v1138, -inf
        %1191 = vmax.xlane.f32.xlu0 %v1190
        %v1192 = vpop.xlane.xlu0 %1191
        %v1193 = vsel %vm1189, %v1184, -inf
        %1194 = vmax.xlane.f32.xlu0 %v1193
        %v1195 = vpop.xlane.xlu0 %1194
        %v1196 = vsub.f32 %v1138, %v1192
        %v1197 = vsub.f32 %v1184, %v1195
        %v1198 = vmul.f32 %v1196, 1.442695
        %v1199 = vpow.pop %v1198
        %v1200 = vmul.f32 %v1197, 1.442695
        %v1201 = vpow.pop %v1200
        %v1202 = vsel %vm1189, %v1199, 0.0
        %1203 = vadd.xlane.f32.xlu0 %v1202
        %v1204 = vpop.xlane.xlu0 %1203
        %v1205 = vsel %vm1189, %v1201, 0.0
        %1206 = vadd.xlane.f32.xlu0 %v1205
        %v1207 = vpop.xlane.xlu0 %1206
        %v1208 = vrcp.pop %v1204
        %v1209 = vrcp.pop %v1207
        %v1210 = vmul.f32 %v1199, %v1208
        %v1211 = vmul.f32 %v1201, %v1209
        %v1212 = vpack.c.bf16 %v1210, %v1210
        %v1213 = vpack.c.bf16 %v1211, %v1211
        %v1215 = vsel %vm1189, %v1212, 0
        %vm1217 = vcmask 1043456
        %v1219 = vsel %vm1217, %v1079, 0
        %1221 = vmatprep.subr.bf16.mxu0 0
        %1222 = vmatpush1.bf16.msra.mxu0 %v1219
        %1223 = vmatprep.subr.bf16.mxu0 0
        %1224 = vmatpush1.bf16.msra.mxu0 0
        %1225 = vmatprep.subr.bf16.mxu0 0
        %1226 = vmatpush1.bf16.msra.mxu0 0
        %1227 = vmatprep.subr.bf16.mxu0 0
        %1228 = vmatpush1.bf16.msra.mxu0 0
        %1229 = vmatprep.subr.bf16.mxu0 0
        %1230 = vmatpush1.bf16.msra.mxu0 0
        %1231 = vmatprep.subr.bf16.mxu0 0
        %1232 = vmatpush1.bf16.msra.mxu0 0
        %1233 = vmatprep.subr.bf16.mxu0 0
        %1234 = vmatpush1.bf16.msra.mxu0 0
        %1235 = vmatprep.subr.bf16.mxu0 0
        %1236 = vmatpush1.bf16.msra.mxu0 0
        %1237 = vmatprep.subr.bf16.mxu0 0
        %1238 = vmatpush1.bf16.msra.mxu0 0
        %1239 = vmatprep.subr.bf16.mxu0 0
        %1240 = vmatpush1.bf16.msra.mxu0 0
        %1241 = vmatprep.subr.bf16.mxu0 0
        %1242 = vmatpush1.bf16.msra.mxu0 0
        %1243 = vmatprep.subr.bf16.mxu0 0
        %1244 = vmatpush1.bf16.msra.mxu0 0
        %1245 = vmatprep.subr.bf16.mxu0 0
        %1246 = vmatpush1.bf16.msra.mxu0 0
        %1247 = vmatprep.subr.bf16.mxu0 0
        %1248 = vmatpush1.bf16.msra.mxu0 0
        %1249 = vmatprep.subr.bf16.mxu0 0
        %1250 = vmatpush1.bf16.msra.mxu0 0
        %1251 = vmatprep.subr.bf16.mxu0 0
        %1252 = vmatpush1.bf16.msra.mxu0 0
        %1253 = vmatprep.mubr.bf16.mxu0 0
        %1254 = vmatmul.mubr.bf16.gmra.mrb[0].mxu0 %v1215
        %v1255 = vpop.f32.mrb[0].mxu0
        %v1256 = vadd.f32 0.0, %v1255
        %v1257 = vpop.f32.mrb[0].mxu0
        %v1258 = vpop.f32.mrb[0].mxu0
        %v1259 = vpop.f32.mrb[0].mxu0
        %1260 = vdwg.mxu0
        %v1262 = vsel %vm1189, %v1213, 0
        %v1265 = vsel %vm1217, %v1088, 0
        %1267 = vmatprep.subr.bf16.mxu0 0
        %1268 = vmatpush1.bf16.msra.mxu0 %v1265
        %1269 = vmatprep.subr.bf16.mxu0 0
        %1270 = vmatpush1.bf16.msra.mxu0 0
        %1271 = vmatprep.subr.bf16.mxu0 0
        %1272 = vmatpush1.bf16.msra.mxu0 0
        %1273 = vmatprep.subr.bf16.mxu0 0
        %1274 = vmatpush1.bf16.msra.mxu0 0
        %1275 = vmatprep.subr.bf16.mxu0 0
        %1276 = vmatpush1.bf16.msra.mxu0 0
        %1277 = vmatprep.subr.bf16.mxu0 0
        %1278 = vmatpush1.bf16.msra.mxu0 0
        %1279 = vmatprep.subr.bf16.mxu0 0
        %1280 = vmatpush1.bf16.msra.mxu0 0
        %1281 = vmatprep.subr.bf16.mxu0 0
        %1282 = vmatpush1.bf16.msra.mxu0 0
        %1283 = vmatprep.subr.bf16.mxu0 0
        %1284 = vmatpush1.bf16.msra.mxu0 0
        %1285 = vmatprep.subr.bf16.mxu0 0
        %1286 = vmatpush1.bf16.msra.mxu0 0
        %1287 = vmatprep.subr.bf16.mxu0 0
        %1288 = vmatpush1.bf16.msra.mxu0 0
        %1289 = vmatprep.subr.bf16.mxu0 0
        %1290 = vmatpush1.bf16.msra.mxu0 0
        %1291 = vmatprep.subr.bf16.mxu0 0
        %1292 = vmatpush1.bf16.msra.mxu0 0
        %1293 = vmatprep.subr.bf16.mxu0 0
        %1294 = vmatpush1.bf16.msra.mxu0 0
        %1295 = vmatprep.subr.bf16.mxu0 0
        %1296 = vmatpush1.bf16.msra.mxu0 0
        %1297 = vmatprep.subr.bf16.mxu0 0
        %1298 = vmatpush1.bf16.msra.mxu0 0
        %1299 = vmatprep.mubr.bf16.mxu0 0
        %1300 = vmatmul.mubr.bf16.gmra.mrb[0].mxu0 %v1262
        %v1301 = vpop.f32.mrb[0].mxu0
        %v1302 = vadd.f32 0.0, %v1301
        %v1303 = vpop.f32.mrb[0].mxu0
        %v1304 = vpop.f32.mrb[0].mxu0
        %v1305 = vpop.f32.mrb[0].mxu0
        %1306 = vdwg.mxu0
        %1308 = vrot.lane.b32.xlu0 %v1302, 16
        %v1309 = vpop.permute.xlu0 %1308
        %v1311 = vsel %vm1096, %v1256, %v1309
        %v1312 = vpack.c.bf16 %v1311, %v1311
        %v1313 = vld [vmem:[%s704] sm:$0xf]
        %v1314 = vld [vmem:[%s704 + $0x4] sm:$0xf]
        %v1315 = vld [vmem:[%s704 + $0x8] sm:$0xf]
        %v1316 = vld [vmem:[%s704 + $0xc] sm:$0xf]
        %v1321 = vunpack.c.l.b16 %v1313
        %v1322 = vunpack.c.l.b16 %v1314
        %v1323 = vunpack.c.l.b16 %v1315
        %v1324 = vunpack.c.l.b16 %v1316
        %v1325 = vpack.c.b16 %v1322, %v1321
        %v1326 = vpack.c.b16 %v1324, %v1323
        %v1330 = vsel %vm921, %v1312, 0
        %1332 = vmatprep.subr.bf16.mxu0 0
        %1333 = vmatpush1.bf16.msra.mxu0 %v1325
        %1334 = vmatprep.subr.bf16.mxu0 0
        %1335 = vmatpush1.bf16.msra.mxu0 %v1326
        %1336 = vmatprep.subr.bf16.mxu0 0
        %1337 = vmatpush1.bf16.msra.mxu0 0
        %1338 = vmatprep.subr.bf16.mxu0 0
        %1339 = vmatpush1.bf16.msra.mxu0 0
        %1340 = vmatprep.subr.bf16.mxu0 0
        %1341 = vmatpush1.bf16.msra.mxu0 0
        %1342 = vmatprep.subr.bf16.mxu0 0
        %1343 = vmatpush1.bf16.msra.mxu0 0
        %1344 = vmatprep.subr.bf16.mxu0 0
        %1345 = vmatpush1.bf16.msra.mxu0 0
        %1346 = vmatprep.subr.bf16.mxu0 0
        %1347 = vmatpush1.bf16.msra.mxu0 0
        %1348 = vmatprep.subr.bf16.mxu0 0
        %1349 = vmatpush1.bf16.msra.mxu0 0
        %1350 = vmatprep.subr.bf16.mxu0 0
        %1351 = vmatpush1.bf16.msra.mxu0 0
        %1352 = vmatprep.subr.bf16.mxu0 0
        %1353 = vmatpush1.bf16.msra.mxu0 0
        %1354 = vmatprep.subr.bf16.mxu0 0
        %1355 = vmatpush1.bf16.msra.mxu0 0
        %1356 = vmatprep.subr.bf16.mxu0 0
        %1357 = vmatpush1.bf16.msra.mxu0 0
        %1358 = vmatprep.subr.bf16.mxu0 0
        %1359 = vmatpush1.bf16.msra.mxu0 0
        %1360 = vmatprep.subr.bf16.mxu0 0
        %1361 = vmatpush1.bf16.msra.mxu0 0
        %1362 = vmatprep.subr.bf16.mxu0 0
        %1363 = vmatpush1.bf16.msra.mxu0 0
        %1364 = vmatprep.mubr.bf16.mxu0 0
        %1365 = vmatmul.mubr.bf16.gmra.mrb[0].mxu0 %v1330
        %v1366 = vpop.f32.mrb[0].mxu0
        %v1367 = vadd.f32 %v903, %v1366
        %v1368 = vpop.f32.mrb[0].mxu0
        %v1369 = vpop.f32.mrb[0].mxu0
        %v1370 = vpop.f32.mrb[0].mxu0
        %1371 = vdwg.mxu0
        %v1372 = vld [vmem:[%s835] sm:$0x1]
        %v1373 = vld [vmem:[%s838] sm:$0x1]
        %v1374 = vsel %vm921, %v1367, 0.0
        %1375 = vadd.xlane.f32.xlu0 %v1374
        %v1376 = vpop.xlane.xlu0 %1375
        %v1377 = vrcp.pop 32.0
        %v1378 = vmul.f32 %v1376, %v1377
        %v1379 = vsub.f32 %v1367, %v1378
        %v1380 = vmul.f32 %v1379, %v1379
        %v1381 = vsel %vm921, %v1380, 0.0
        %1382 = vadd.xlane.f32.xlu0 %v1381
        %v1383 = vpop.xlane.xlu0 %1382
        %v1384 = vmul.f32 %v1383, %v1377
        %v1385 = vadd.f32 %v1384, 1e-06
        %v1386 = vrsqrt.pop %v1385
        %v1387 = vmul.f32 %v1385, %v1386
        %vm1388 = vcmp.eq.f32.partialorder %v1385, inf
        %v1389 = vsel %vm1388, %v1385, %v1387
        %vm1390 = vcmp.eq.f32.partialorder %v1385, 0.0
        %v1391 = vand.u32 %v1385, 2147483648
        %v1392 = vsel %vm1390, %v1391, %v1389
        %v1393 = vrcp.pop %v1392
        %v1394 = vmul.f32 %v1379, %v1393
        %v1396 = vlaneseq
        %v1397 = vshrl.u32 %v1396, 7
        %v1398 = vsub.s32 0, %v1397
        %v1399 = vrot.slane %v1372, %v1398
        %v1401 = vmul.f32 %v1394, %v1399
        %v1403 = vlaneseq
        %v1404 = vshrl.u32 %v1403, 7
        %v1405 = vsub.s32 0, %v1404
        %v1406 = vrot.slane %v1373, %v1405
        %v1408 = vadd.f32 %v1401, %v1406
        %v1409 = vpack.c.bf16 %v1408, %v1408
        %v1410 = vld [vmem:[%s713] sm:$0xf]
        %v1411 = vld [vmem:[%s713 + $0x4] sm:$0xf]
        %v1412 = vld [vmem:[%s713 + $0x8] sm:$0xf]
        %v1413 = vld [vmem:[%s713 + $0xc] sm:$0xf]
        %v1414 = vld [vmem:[%s841] sm:$0x1]
        %v1416 = vlaneseq
        %v1417 = vshrl.u32 %v1416, 7
        %v1418 = vsub.s32 0, %v1417
        %v1419 = vrot.slane %v1414, %v1418
        %v1425 = vunpack.c.l.b16 %v1410
        %v1426 = vunpack.c.l.b16 %v1411
        %v1427 = vunpack.c.l.b16 %v1412
        %v1428 = vunpack.c.l.b16 %v1413
        %v1429 = vpack.c.b16 %v1426, %v1425
        %v1430 = vpack.c.b16 %v1428, %v1427
        %v1434 = vsel %vm921, %v1409, 0
        %1436 = vmatprep.subr.bf16.mxu0 0
        %1437 = vmatpush1.bf16.msra.mxu0 %v1429
        %1438 = vmatprep.subr.bf16.mxu0 0
        %1439 = vmatpush1.bf16.msra.mxu0 %v1430
        %1440 = vmatprep.subr.bf16.mxu0 0
        %1441 = vmatpush1.bf16.msra.mxu0 0
        %1442 = vmatprep.subr.bf16.mxu0 0
        %1443 = vmatpush1.bf16.msra.mxu0 0
        %1444 = vmatprep.subr.bf16.mxu0 0
        %1445 = vmatpush1.bf16.msra.mxu0 0
        %1446 = vmatprep.subr.bf16.mxu0 0
        %1447 = vmatpush1.bf16.msra.mxu0 0
        %1448 = vmatprep.subr.bf16.mxu0 0
        %1449 = vmatpush1.bf16.msra.mxu0 0
        %1450 = vmatprep.subr.bf16.mxu0 0
        %1451 = vmatpush1.bf16.msra.mxu0 0
        %1452 = vmatprep.subr.bf16.mxu0 0
        %1453 = vmatpush1.bf16.msra.mxu0 0
        %1454 = vmatprep.subr.bf16.mxu0 0
        %1455 = vmatpush1.bf16.msra.mxu0 0
        %1456 = vmatprep.subr.bf16.mxu0 0
        %1457 = vmatpush1.bf16.msra.mxu0 0
        %1458 = vmatprep.subr.bf16.mxu0 0
        %1459 = vmatpush1.bf16.msra.mxu0 0
        %1460 = vmatprep.subr.bf16.mxu0 0
        %1461 = vmatpush1.bf16.msra.mxu0 0
        %1462 = vmatprep.subr.bf16.mxu0 0
        %1463 = vmatpush1.bf16.msra.mxu0 0
        %1464 = vmatprep.subr.bf16.mxu0 0
        %1465 = vmatpush1.bf16.msra.mxu0 0
        %1466 = vmatprep.subr.bf16.mxu0 0
        %1467 = vmatpush1.bf16.msra.mxu0 0
        %1468 = vmatprep.mubr.bf16.mxu0 0
        %1469 = vmatmul.mubr.bf16.gmra.mrb[0].mxu0 %v1434
        %v1470 = vpop.f32.mrb[0].mxu0
        %v1471 = vadd.f32 %v1419, %v1470
        %v1472 = vpop.f32.mrb[0].mxu0
        %v1473 = vpop.f32.mrb[0].mxu0
        %v1474 = vpop.f32.mrb[0].mxu0
        %1475 = vdwg.mxu0
        %v1476 = vmax.f32 %v1471, 0.0
        %v1477 = vpack.c.bf16 %v1476, %v1476
        %v1478 = vld [vmem:[%s846] sm:$0xf]
        %v1479 = vld [vmem:[%s846 + $0x4] sm:$0xf]
        %v1480 = vld [vmem:[%s846 + $0x8] sm:$0xf]
        %v1481 = vld [vmem:[%s846 + $0xc] sm:$0xf]
        %v1482 = vld [vmem:[%s846 + $0x10] sm:$0xf]
        %v1483 = vld [vmem:[%s846 + $0x14] sm:$0xf]
        %v1484 = vld [vmem:[%s846 + $0x18] sm:$0xf]
        %v1485 = vld [vmem:[%s846 + $0x1c] sm:$0xf]
        %v1486 = vld [vmem:[%s849] sm:$0x1]
        %v1488 = vlaneseq
        %v1489 = vshrl.u32 %v1488, 7
        %v1490 = vsub.s32 0, %v1489
        %v1491 = vrot.slane %v1486, %v1490
        %v1501 = vunpack.c.l.b16 %v1478
        %v1502 = vunpack.c.l.b16 %v1479
        %v1503 = vunpack.c.l.b16 %v1480
        %v1504 = vunpack.c.l.b16 %v1481
        %v1505 = vunpack.c.l.b16 %v1482
        %v1506 = vunpack.c.l.b16 %v1483
        %v1507 = vunpack.c.l.b16 %v1484
        %v1508 = vunpack.c.l.b16 %v1485
        %v1509 = vpack.c.b16 %v1502, %v1501
        %v1510 = vpack.c.b16 %v1504, %v1503
        %v1511 = vpack.c.b16 %v1506, %v1505
        %v1512 = vpack.c.b16 %v1508, %v1507
        %vm1517 = vcmask 523264
        %v1519 = vsel %vm1517, %v1477, 0
        %1521 = vmatprep.subr.bf16.mxu0 0
        %1522 = vmatpush1.bf16.msra.mxu0 %v1509
        %1523 = vmatprep.subr.bf16.mxu0 0
        %1524 = vmatpush1.bf16.msra.mxu0 %v1510
        %1525 = vmatprep.subr.bf16.mxu0 0
        %1526 = vmatpush1.bf16.msra.mxu0 %v1511
        %1527 = vmatprep.subr.bf16.mxu0 0
        %1528 = vmatpush1.bf16.msra.mxu0 %v1512
        %1529 = vmatprep.subr.bf16.mxu0 0
        %1530 = vmatpush1.bf16.msra.mxu0 0
        %1531 = vmatprep.subr.bf16.mxu0 0
        %1532 = vmatpush1.bf16.msra.mxu0 0
        %1533 = vmatprep.subr.bf16.mxu0 0
        %1534 = vmatpush1.bf16.msra.mxu0 0
        %1535 = vmatprep.subr.bf16.mxu0 0
        %1536 = vmatpush1.bf16.msra.mxu0 0
        %1537 = vmatprep.subr.bf16.mxu0 0
        %1538 = vmatpush1.bf16.msra.mxu0 0
        %1539 = vmatprep.subr.bf16.mxu0 0
        %1540 = vmatpush1.bf16.msra.mxu0 0
        %1541 = vmatprep.subr.bf16.mxu0 0
        %1542 = vmatpush1.bf16.msra.mxu0 0
        %1543 = vmatprep.subr.bf16.mxu0 0
        %1544 = vmatpush1.bf16.msra.mxu0 0
        %1545 = vmatprep.subr.bf16.mxu0 0
        %1546 = vmatpush1.bf16.msra.mxu0 0
        %1547 = vmatprep.subr.bf16.mxu0 0
        %1548 = vmatpush1.bf16.msra.mxu0 0
        %1549 = vmatprep.subr.bf16.mxu0 0
        %1550 = vmatpush1.bf16.msra.mxu0 0
        %1551 = vmatprep.subr.bf16.mxu0 0
        %1552 = vmatpush1.bf16.msra.mxu0 0
        %1553 = vmatprep.mubr.bf16.mxu0 0
        %1554 = vmatmul.mubr.bf16.gmra.mrb[0].mxu0 %v1519
        %v1555 = vpop.f32.mrb[0].mxu0
        %v1556 = vadd.f32 %v1491, %v1555
        %v1557 = vpop.f32.mrb[0].mxu0
        %v1558 = vpop.f32.mrb[0].mxu0
        %v1559 = vpop.f32.mrb[0].mxu0
        %1560 = vdwg.mxu0
        %v1561 = vadd.f32 %v1556, %v1408
        %v1562 = vld [vmem:[%s852] sm:$0x1]
        %v1563 = vld [vmem:[%s855] sm:$0x1]
        %v1564 = vsel %vm921, %v1561, 0.0
        %1565 = vadd.xlane.f32.xlu0 %v1564
        %v1566 = vpop.xlane.xlu0 %1565
        %v1567 = vmul.f32 %v1566, %v1377
        %v1568 = vsub.f32 %v1561, %v1567
        %v1569 = vmul.f32 %v1568, %v1568
        %v1570 = vsel %vm921, %v1569, 0.0
        %1571 = vadd.xlane.f32.xlu0 %v1570
        %v1572 = vpop.xlane.xlu0 %1571
        %v1573 = vmul.f32 %v1572, %v1377
        %v1574 = vadd.f32 %v1573, 1e-06
        %v1575 = vrsqrt.pop %v1574
        %v1576 = vmul.f32 %v1574, %v1575
        %vm1577 = vcmp.eq.f32.partialorder %v1574, inf
        %v1578 = vsel %vm1577, %v1574, %v1576
        %vm1579 = vcmp.eq.f32.partialorder %v1574, 0.0
        %v1580 = vand.u32 %v1574, 2147483648
        %v1581 = vsel %vm1579, %v1580, %v1578
        %v1582 = vrcp.pop %v1581
        %v1583 = vmul.f32 %v1568, %v1582
        %v1585 = vlaneseq
        %v1586 = vshrl.u32 %v1585, 7
        %v1587 = vsub.s32 0, %v1586
        %v1588 = vrot.slane %v1562, %v1587
        %v1590 = vmul.f32 %v1583, %v1588
        %v1592 = vlaneseq
        %v1593 = vshrl.u32 %v1592, 7
        %v1594 = vsub.s32 0, %v1593
        %v1595 = vrot.slane %v1563, %v1594
        %v1597 = vadd.f32 %v1590, %v1595
        %1598 = vst.msk [vmem:[%s814] sm:$0xff] %vm921, %v1597
        %s1599 = sand.u32 %s485, 1
        %s1600 = scalar_lea.sflag [#allocation4], %s1599
        %s1601 = sand.u32 %s485, 1
        %s1602 = smul.addr %s1601, 8
        %s1603 = scalar_lea.vmem [#allocation11], %s1602
        // Predicated region
        $region113: #{tpu_custom_call.1} parent=87 // pred_check
          %p1604 = pneg %p495
        $region114: #{tpu_custom_call.1} parent=87 // pred_check_branch
          %1606 = sbr.rel (%p1604) target = $region116
        $region115: #{tpu_custom_call.1} parent=87 // pred_region
          %s1608 = ssub.s32 128, 128
          %1609 = vsyncadd %s1600, %s1608
          %s1610 = smul.addr %s42, 128
          %s1611 = scalar_lea.hbm %s17, %s1610
          %s1613 = sshll.u32 %s1603, 4
          %s1614 = int_to_ptr.vmem [resolvable:$true] %s1613
          %1616 = dma.vmem_to_hbm [thread:$0]  %s1614, 128, %s1611, %s1600
        $region116: #{tpu_custom_call.1} parent=87 // pred_fallthru
          _
      $region88: #{tpu_custom_call.1} parent=5 // pred_fallthru
        _
      %p1617 = scmp.le.s32.totalorder 2, %s33
      // Predicated region
      $region117: #{tpu_custom_call.1} parent=5 // pred_check
        %p1618 = pneg %p1617
      $region118: #{tpu_custom_call.1} parent=5 // pred_check_branch
        %1620 = sbr.rel (%p1618) target = $region120
      $region119: #{tpu_custom_call.1} parent=5 // pred_region
        %s1621 = ssub.s32 %s33, 2
        // Predicated region
        $region121: #{tpu_custom_call.1} parent=119 // pred_check
          %p1622 = pneg %p501
        $region122: #{tpu_custom_call.1} parent=119 // pred_check_branch
          %1624 = sbr.rel (%p1622) target = $region124
        $region123: #{tpu_custom_call.1} parent=119 // pred_region
          %s1625 = sand.u32 %s486, 1
          %s1626 = scalar_lea.sflag [#allocation4], %s1625
          %s1627 = sand.u32 %s486, 1
          %s1628 = smul.addr %s1627, 8
          %s1629 = scalar_lea.vmem [#allocation11], %s1628
          %1630 = dma.done %s1626, 128
        $region124: #{tpu_custom_call.1} parent=119 // pred_fallthru
          _
      $region120: #{tpu_custom_call.1} parent=5 // pred_fallthru
        _
    $region6: #{tpu_custom_call.1} parent=1 // loop_footer
      %s37 = sadd.s32 1, %s33
    $region7: #{tpu_custom_call.1} parent=1 // loop_footer_branch
      %32 = sbr.rel target = $region3
    $region8: #{tpu_custom_call.1} parent=1 // loop_exit
      _
    %1631 = vsyncpa [#allocation3], 1
    %s1632 = scalar_lea.sflag [#allocation3], 1
    %1633 = vsyncpa %s1632, 1
    %1634 = vsyncpa [#allocation6], 1
    %1635 = vsyncpa [#allocation9], 1
    %s1636 = scalar_lea.sflag [#allocation9], 1
    %1637 = vsyncpa %s1636, 1
    %1638 = vsyncpa [#allocation4], 1
    %s1639 = scalar_lea.sflag [#allocation4], 1
    %1640 = vsyncpa %s1639, 1

</llo_original>
